<compile_context>
chip_gen: v7x
topology: tpu7x:2x2x1
jax: 0.10.0
libtpu: 0.0.40
codegen_flags: <defaults>
</compile_context>

<pallas_src>
import functools

import jax
import jax.numpy as jnp
from jax.experimental import pallas as pl
from jax.experimental.pallas import tpu as pltpu


# ----------------------------------------------------------------------------
# Fused Pallas kernel
# ----------------------------------------------------------------------------
def _spatial_attention_kernel(x_ref, w_ref, row_ref, col_ref, o_ref,
                              *, H, W, K, B_TILE):
    """out = x * sigmoid(BN(Conv7x7(ChannelPool(x)))) for B_TILE batch elements.

    x_ref   : (B_TILE, C, H*W) VMEM block (lane-dense last dim)
    w_ref   : (2, K*K + 1) f32 VMEM.  Row 0: BN-folded taps for the max plane
              plus the folded BN bias in the last column; row 1: BN- and
              1/C-folded taps for the mean plane (last column is 0).
    row_ref : (1, H*W) int32 -- row index i of each flattened spatial position
    col_ref : (1, H*W) int32 -- col index j of each flattened spatial position
    o_ref   : (B_TILE, C, H*W) VMEM block
    """
    HW = H * W
    pad = (K - 1) // 2
    KK = K * K

    w = w_ref[...]                      # (2, KK+1) f32
    row = row_ref[...]                  # (1, HW) int32
    col = col_ref[...]                  # (1, HW) int32

    # Hoisted per-offset validity masks.  Tap (r, s) reads input position
    # (i + r - pad, j + s - pad); out-of-image positions contribute 0, which
    # reproduces the conv's zero padding without any padded scratch plane.
    row_ok = [(row >= pad - r) & (row < H + pad - r) for r in range(K)]
    col_ok = [(col >= pad - s) & (col < W + pad - s) for s in range(K)]

    for b in range(B_TILE):
        # --- ChannelPool on the lane-dense layout ---------------------------
        # The f32 upcast of x is only live for these two reductions; x is
        # re-read from the VMEM block for the gating multiply below.
        xb = x_ref[b].astype(jnp.float32)                  # (C, HW)
        cmax = jnp.max(xb, axis=0, keepdims=True)          # (1, HW)
        csum = jnp.sum(xb, axis=0, keepdims=True)          # (1, HW); 1/C folded in taps
        planes = jnp.concatenate([cmax, csum], axis=0)     # (2, HW)

        # --- 7x7 conv as K*K shifted scale-adds on the flattened axis -------
        # A 2-D shift (dy, dx) is a 1-D roll by dy*W+dx on the flattened axis
        # plus an in-image mask.  Rolls land on the XLU (otherwise idle); two
        # interleaved accumulator chains give the VALU some ILP.
        acc0 = jnp.zeros((2, HW), jnp.float32)
        acc1 = jnp.zeros((2, HW), jnp.float32)
        t = 0
        for r in range(K):
            for s in range(K):
                delta = (r - pad) * W + (s - pad)
                if delta == 0:
                    tap = planes                           # center tap: always valid
                else:
                    rolled = pltpu.roll(planes, (-delta) % HW, axis=1)
                    tap = jnp.where(row_ok[r] & col_ok[s], rolled, 0.0)
                contrib = w[:, t:t + 1] * tap              # (2,1) * (2,HW)
                if t % 2 == 0:
                    acc0 = acc0 + contrib
                else:
                    acc1 = acc1 + contrib
                t += 1
        acc = acc0 + acc1                                  # (2, HW)

        # --- folded BN bias, sigmoid gate, gating multiply -------------------
        att = acc[0:1, :] + acc[1:2, :] + w[0:1, KK:KK + 1]   # (1, HW)
        gate = jax.nn.sigmoid(att)                             # (1, HW) f32 (EUP)

        xg = x_ref[b]                                          # re-read, input dtype
        if xg.dtype == jnp.bfloat16:
            # bf16 epilogue: halves VALU work and store bytes on v6e/v7x.
            # TODO(synk): on v5e (no bf16 VALU) prefer an f32 multiply + bf16 store.
            o_ref[b] = xg * gate.astype(jnp.bfloat16)
        else:
            o_ref[b] = (xg * gate).astype(o_ref.dtype)


# ----------------------------------------------------------------------------
# Wrapper
# ----------------------------------------------------------------------------
def _pick_batch_tile(n, per_batch_bytes):
    """Batch elements per grid step: amortize the ~0.35 us per-step overhead,
    but keep >=2 parallel grid blocks (v7x has 2 TensorCores) and a small
    unroll factor."""
    target_bytes = 1 << 20                       # aim for ~1 MiB blocks
    bt = max(1, min(8, target_bytes // max(per_batch_bytes, 1)))
    if n >= 2:
        bt = min(bt, n // 2)                     # guarantee >=2 grid blocks
    bt = max(1, bt)
    while n % bt:                                # need a divisor of N
        bt -= 1
    return bt


def spatial_attention(x_nchw, conv_w, bn):
    """CBAM Spatial_Attention forward.  x_nchw: (N,C,H,W); conv_w: (1,2,K,K)."""
    N, C, H, W = x_nchw.shape
    O, I, kh, kw = conv_w.shape
    assert O == 1 and I == 2 and kh == kw, "CBAM spatial-attention conv is 2->1, square"
    K = int(kh)
    HW = H * W

    # Fold eval-mode BatchNorm (single feature) and 1/C (mean -> sum) into taps.
    scale = (bn['gamma'].astype(jnp.float32) /
             jnp.sqrt(bn['var'].astype(jnp.float32) + bn['eps']))[0]
    bias = (bn['beta'].astype(jnp.float32) - bn['mean'].astype(jnp.float32) * scale)[0]
    w_max = conv_w[0, 0].astype(jnp.float32).reshape(-1) * scale          # (K*K,)
    w_mean = conv_w[0, 1].astype(jnp.float32).reshape(-1) * (scale / C)   # (K*K,)
    w_packed = jnp.stack([
        jnp.concatenate([w_max, jnp.reshape(bias, (1,))]),
        jnp.concatenate([w_mean, jnp.zeros((1,), jnp.float32)]),
    ], axis=0)                                                            # (2, K*K+1)

    # Row/col index of every flattened spatial position, used by the in-kernel
    # zero-padding masks (avoids in-kernel integer div/mod on vectors).
    flat = jnp.arange(HW, dtype=jnp.int32)
    row_idx = (flat // W).reshape(1, HW)
    col_idx = (flat % W).reshape(1, HW)

    # Lane-dense view of x: last dim H*W instead of W-wide partial vregs.
    x_flat = x_nchw.reshape(N, C, HW)

    itemsize = jnp.dtype(x_nchw.dtype).itemsize
    b_tile = _pick_batch_tile(N, C * HW * itemsize)

    kernel = functools.partial(_spatial_attention_kernel, H=H, W=W, K=K, B_TILE=b_tile)

    out_flat = pl.pallas_call(
        kernel,
        out_shape=jax.ShapeDtypeStruct((N, C, HW), x_nchw.dtype),
        grid=(N // b_tile,),
        in_specs=[
            pl.BlockSpec((b_tile, C, HW), lambda n: (n, 0, 0)),
            pl.BlockSpec((2, K * K + 1), lambda n: (0, 0)),
            pl.BlockSpec((1, HW), lambda n: (0, 0)),
            pl.BlockSpec((1, HW), lambda n: (0, 0)),
        ],
        out_specs=pl.BlockSpec((b_tile, C, HW), lambda n: (n, 0, 0)),
        compiler_params=pltpu.CompilerParams(
            dimension_semantics=("parallel",)),
    )(x_flat, w_packed, row_idx, col_idx)

    return out_flat.reshape(N, C, H, W)


# ----------------------------------------------------------------------------
# Pure-JAX reference (for correctness check only)
# ----------------------------------------------------------------------------
def spatial_attention_reference(x, conv_w, bn):
    cmax = jnp.max(x, axis=1, keepdims=True)
    cmean = jnp.mean(x, axis=1, keepdims=True)
    comp = jnp.concatenate([cmax, cmean], axis=1)                     # (N,2,H,W)
    pad = (conv_w.shape[-1] - 1) // 2
    conv = jax.lax.conv_general_dilated(
        comp, conv_w, window_strides=(1, 1), padding=[(pad, pad), (pad, pad)],
        dimension_numbers=('NCHW', 'OIHW', 'NCHW'))
    scale = bn['gamma'] / jnp.sqrt(bn['var'] + bn['eps'])
    bias = bn['beta'] - bn['mean'] * scale
    att = conv * scale.reshape(1, -1, 1, 1) + bias.reshape(1, -1, 1, 1)
    return x * jax.nn.sigmoid(att)


# ----------------------------------------------------------------------------
if __name__ == "__main__":
    key = jax.random.PRNGKey(0)
    k_x, k_w, k_g, k_b, k_m, k_v = jax.random.split(key, 6)

    # NCHW input like the PyTorch module: batch=2, channels=4, 16x16 spatial.
    x = jax.random.normal(k_x, (2, 4, 16, 16), jnp.float32)

    # Conv2d(2 -> 1, kernel_size=7, padding=3, bias=False) weight (O, I, kh, kw).
    conv_w = jax.random.normal(k_w, (1, 2, 7, 7), jnp.float32) * (1.0 / (2 * 49)) ** 0.5

    # Eval-mode BatchNorm2d(1) with non-trivial affine params / running stats.
    bn = dict(
        gamma=1.0 + 0.1 * jax.random.normal(k_g, (1,), jnp.float32),
        beta=0.1 * jax.random.normal(k_b, (1,), jnp.float32),
        mean=0.1 * jax.random.normal(k_m, (1,), jnp.float32),
        var=jnp.abs(1.0 + 0.1 * jax.random.normal(k_v, (1,), jnp.float32)),
        eps=1e-5,
    )

    fwd = jax.jit(lambda inp: spatial_attention(inp, conv_w, bn))
    y = fwd(x)
    jax.block_until_ready(y)

    y_ref = spatial_attention_reference(x, conv_w, bn)
    assert y.shape == x.shape, y.shape
    assert bool(jnp.all(jnp.isfinite(y)))
    max_err = float(jnp.max(jnp.abs(y - y_ref)))
    assert max_err < 1e-4, f"max abs error vs reference: {max_err}"
    print("KERNEL_OK")
</pallas_src>

<mosaic_0001>
module attributes {stable_mosaic.version = 11 : i64} {
  func.func @_spatial_attention_kernel(%arg0: i32, %arg1: memref<1x4x256xf32, #tpu.memory_space<vmem>>, %arg2: memref<2x50xf32, #tpu.memory_space<vmem>>, %arg3: memref<1x256xi32, #tpu.memory_space<vmem>>, %arg4: memref<1x256xi32, #tpu.memory_space<vmem>>, %arg5: memref<1x4x256xf32, #tpu.memory_space<vmem>>) attributes {dimension_semantics = [#tpu.dimension_semantics<parallel>], iteration_bounds = array<i64: 2>, scalar_prefetch = 0 : i64, scratch_operands = 0 : i64, tpu.core_type = #tpu.core_type<tc>, window_params = [{transform_indices = @transform_0, window_bounds = array<i64: 1, 4, 256>}, {pipeline_mode = #tpu.pipeline_mode<synchronous>, transform_indices = @transform_1, window_bounds = array<i64: 2, 50>}, {pipeline_mode = #tpu.pipeline_mode<synchronous>, transform_indices = @transform_2, window_bounds = array<i64: 1, 256>}, {pipeline_mode = #tpu.pipeline_mode<synchronous>, transform_indices = @transform_3, window_bounds = array<i64: 1, 256>}, {transform_indices = @transform_4, window_bounds = array<i64: 1, 4, 256>}]} {
    %c0 = arith.constant 0 : index
    %c0_0 = arith.constant 0 : index
    %0 = vector.load %arg2[%c0, %c0_0] : memref<2x50xf32, #tpu.memory_space<vmem>>, vector<2x50xf32>
    %c0_1 = arith.constant 0 : index
    %c0_2 = arith.constant 0 : index
    %1 = vector.load %arg3[%c0_1, %c0_2] : memref<1x256xi32, #tpu.memory_space<vmem>>, vector<1x256xi32>
    %c0_3 = arith.constant 0 : index
    %c0_4 = arith.constant 0 : index
    %2 = vector.load %arg4[%c0_3, %c0_4] : memref<1x256xi32, #tpu.memory_space<vmem>>, vector<1x256xi32>
    %c3_i32 = arith.constant 3 : i32
    %3 = vector.broadcast %c3_i32 : i32 to vector<1x256xi32>
    %4 = arith.cmpi sge, %1, %3 : vector<1x256xi32>
    %c19_i32 = arith.constant 19 : i32
    %5 = vector.broadcast %c19_i32 : i32 to vector<1x256xi32>
    %6 = arith.cmpi slt, %1, %5 : vector<1x256xi32>
    %7 = arith.andi %4, %6 : vector<1x256xi1>
    %c2_i32 = arith.constant 2 : i32
    %8 = vector.broadcast %c2_i32 : i32 to vector<1x256xi32>
    %9 = arith.cmpi sge, %1, %8 : vector<1x256xi32>
    %c18_i32 = arith.constant 18 : i32
    %10 = vector.broadcast %c18_i32 : i32 to vector<1x256xi32>
    %11 = arith.cmpi slt, %1, %10 : vector<1x256xi32>
    %12 = arith.andi %9, %11 : vector<1x256xi1>
    %c1_i32 = arith.constant 1 : i32
    %13 = vector.broadcast %c1_i32 : i32 to vector<1x256xi32>
    %14 = arith.cmpi sge, %1, %13 : vector<1x256xi32>
    %c17_i32 = arith.constant 17 : i32
    %15 = vector.broadcast %c17_i32 : i32 to vector<1x256xi32>
    %16 = arith.cmpi slt, %1, %15 : vector<1x256xi32>
    %17 = arith.andi %14, %16 : vector<1x256xi1>
    %c0_i32 = arith.constant 0 : i32
    %18 = vector.broadcast %c0_i32 : i32 to vector<1x256xi32>
    %19 = arith.cmpi sge, %1, %18 : vector<1x256xi32>
    %c16_i32 = arith.constant 16 : i32
    %20 = vector.broadcast %c16_i32 : i32 to vector<1x256xi32>
    %21 = arith.cmpi slt, %1, %20 : vector<1x256xi32>
    %22 = arith.andi %19, %21 : vector<1x256xi1>
    %c-1_i32 = arith.constant -1 : i32
    %23 = vector.broadcast %c-1_i32 : i32 to vector<1x256xi32>
    %24 = arith.cmpi sge, %1, %23 : vector<1x256xi32>
    %c15_i32 = arith.constant 15 : i32
    %25 = vector.broadcast %c15_i32 : i32 to vector<1x256xi32>
    %26 = arith.cmpi slt, %1, %25 : vector<1x256xi32>
    %27 = arith.andi %24, %26 : vector<1x256xi1>
    %c-2_i32 = arith.constant -2 : i32
    %28 = vector.broadcast %c-2_i32 : i32 to vector<1x256xi32>
    %29 = arith.cmpi sge, %1, %28 : vector<1x256xi32>
    %c14_i32 = arith.constant 14 : i32
    %30 = vector.broadcast %c14_i32 : i32 to vector<1x256xi32>
    %31 = arith.cmpi slt, %1, %30 : vector<1x256xi32>
    %32 = arith.andi %29, %31 : vector<1x256xi1>
    %c-3_i32 = arith.constant -3 : i32
    %33 = vector.broadcast %c-3_i32 : i32 to vector<1x256xi32>
    %34 = arith.cmpi sge, %1, %33 : vector<1x256xi32>
    %c13_i32 = arith.constant 13 : i32
    %35 = vector.broadcast %c13_i32 : i32 to vector<1x256xi32>
    %36 = arith.cmpi slt, %1, %35 : vector<1x256xi32>
    %37 = arith.andi %34, %36 : vector<1x256xi1>
    %c3_i32_5 = arith.constant 3 : i32
    %38 = vector.broadcast %c3_i32_5 : i32 to vector<1x256xi32>
    %39 = arith.cmpi sge, %2, %38 : vector<1x256xi32>
    %c19_i32_6 = arith.constant 19 : i32
    %40 = vector.broadcast %c19_i32_6 : i32 to vector<1x256xi32>
    %41 = arith.cmpi slt, %2, %40 : vector<1x256xi32>
    %42 = arith.andi %39, %41 : vector<1x256xi1>
    %c2_i32_7 = arith.constant 2 : i32
    %43 = vector.broadcast %c2_i32_7 : i32 to vector<1x256xi32>
    %44 = arith.cmpi sge, %2, %43 : vector<1x256xi32>
    %c18_i32_8 = arith.constant 18 : i32
    %45 = vector.broadcast %c18_i32_8 : i32 to vector<1x256xi32>
    %46 = arith.cmpi slt, %2, %45 : vector<1x256xi32>
    %47 = arith.andi %44, %46 : vector<1x256xi1>
    %c1_i32_9 = arith.constant 1 : i32
    %48 = vector.broadcast %c1_i32_9 : i32 to vector<1x256xi32>
    %49 = arith.cmpi sge, %2, %48 : vector<1x256xi32>
    %c17_i32_10 = arith.constant 17 : i32
    %50 = vector.broadcast %c17_i32_10 : i32 to vector<1x256xi32>
    %51 = arith.cmpi slt, %2, %50 : vector<1x256xi32>
    %52 = arith.andi %49, %51 : vector<1x256xi1>
    %c0_i32_11 = arith.constant 0 : i32
    %53 = vector.broadcast %c0_i32_11 : i32 to vector<1x256xi32>
    %54 = arith.cmpi sge, %2, %53 : vector<1x256xi32>
    %c16_i32_12 = arith.constant 16 : i32
    %55 = vector.broadcast %c16_i32_12 : i32 to vector<1x256xi32>
    %56 = arith.cmpi slt, %2, %55 : vector<1x256xi32>
    %57 = arith.andi %54, %56 : vector<1x256xi1>
    %c-1_i32_13 = arith.constant -1 : i32
    %58 = vector.broadcast %c-1_i32_13 : i32 to vector<1x256xi32>
    %59 = arith.cmpi sge, %2, %58 : vector<1x256xi32>
    %c15_i32_14 = arith.constant 15 : i32
    %60 = vector.broadcast %c15_i32_14 : i32 to vector<1x256xi32>
    %61 = arith.cmpi slt, %2, %60 : vector<1x256xi32>
    %62 = arith.andi %59, %61 : vector<1x256xi1>
    %c-2_i32_15 = arith.constant -2 : i32
    %63 = vector.broadcast %c-2_i32_15 : i32 to vector<1x256xi32>
    %64 = arith.cmpi sge, %2, %63 : vector<1x256xi32>
    %c14_i32_16 = arith.constant 14 : i32
    %65 = vector.broadcast %c14_i32_16 : i32 to vector<1x256xi32>
    %66 = arith.cmpi slt, %2, %65 : vector<1x256xi32>
    %67 = arith.andi %64, %66 : vector<1x256xi1>
    %c-3_i32_17 = arith.constant -3 : i32
    %68 = vector.broadcast %c-3_i32_17 : i32 to vector<1x256xi32>
    %69 = arith.cmpi sge, %2, %68 : vector<1x256xi32>
    %c13_i32_18 = arith.constant 13 : i32
    %70 = vector.broadcast %c13_i32_18 : i32 to vector<1x256xi32>
    %71 = arith.cmpi slt, %2, %70 : vector<1x256xi32>
    %72 = arith.andi %69, %71 : vector<1x256xi1>
    %c0_19 = arith.constant 0 : index
    %c0_20 = arith.constant 0 : index
    %c0_21 = arith.constant 0 : index
    %73 = vector.load %arg1[%c0_19, %c0_20, %c0_21] : memref<1x4x256xf32, #tpu.memory_space<vmem>>, vector<1x4x256xf32>
    %74 = vector.shape_cast %73 : vector<1x4x256xf32> to vector<4x256xf32>
    %cst = arith.constant dense<0xFF800000> : vector<256xf32>
    %75 = vector.multi_reduction <maximumf>, %74, %cst [0] : vector<4x256xf32> to vector<256xf32>
    %76 = vector.shape_cast %75 : vector<256xf32> to vector<1x256xf32>
    %cst_22 = arith.constant dense<0.000000e+00> : vector<256xf32>
    %77 = vector.multi_reduction <add>, %74, %cst_22 [0] : vector<4x256xf32> to vector<256xf32>
    %78 = vector.shape_cast %77 : vector<256xf32> to vector<1x256xf32>
    %79 = tpu.concatenate %76, %78 in 0 : vector<1x256xf32>, vector<1x256xf32> -> vector<2x256xf32>
    %cst_23 = arith.constant 0.000000e+00 : f32
    %80 = vector.broadcast %cst_23 : f32 to vector<2x256xf32>
    %cst_24 = arith.constant 0.000000e+00 : f32
    %81 = vector.broadcast %cst_24 : f32 to vector<2x256xf32>
    %c51_i32 = arith.constant 51 : i32
    %82 = tpu.dynamic_rotate %79 by %c51_i32 dim 1 : vector<2x256xf32>, i32 -> vector<2x256xf32>
    %83 = arith.andi %7, %42 : vector<1x256xi1>
    %cst_25 = arith.constant 0.000000e+00 : f32
    %84 = vector.shape_cast %83 : vector<1x256xi1> to vector<1x256xi1>
    %85 = vector.broadcast %84 : vector<1x256xi1> to vector<2x256xi1>
    %86 = vector.broadcast %cst_25 : f32 to vector<2x256xf32>
    %87 = arith.select %85, %82, %86 : vector<2x256xi1>, vector<2x256xf32>
    %88 = vector.extract_strided_slice %0 {offsets = [0, 0], sizes = [2, 1], strides = [1, 1]} : vector<2x50xf32> to vector<2x1xf32>
    %89 = vector.broadcast %88 : vector<2x1xf32> to vector<2x256xf32>
    %90 = arith.mulf %89, %87 : vector<2x256xf32>
    %91 = arith.addf %80, %90 : vector<2x256xf32>
    %c50_i32 = arith.constant 50 : i32
    %92 = tpu.dynamic_rotate %79 by %c50_i32 dim 1 : vector<2x256xf32>, i32 -> vector<2x256xf32>
    %93 = arith.andi %7, %47 : vector<1x256xi1>
    %cst_26 = arith.constant 0.000000e+00 : f32
    %94 = vector.shape_cast %93 : vector<1x256xi1> to vector<1x256xi1>
    %95 = vector.broadcast %94 : vector<1x256xi1> to vector<2x256xi1>
    %96 = vector.broadcast %cst_26 : f32 to vector<2x256xf32>
    %97 = arith.select %95, %92, %96 : vector<2x256xi1>, vector<2x256xf32>
    %98 = vector.extract_strided_slice %0 {offsets = [0, 1], sizes = [2, 1], strides = [1, 1]} : vector<2x50xf32> to vector<2x1xf32>
    %99 = vector.broadcast %98 : vector<2x1xf32> to vector<2x256xf32>
    %100 = arith.mulf %99, %97 : vector<2x256xf32>
    %101 = arith.addf %81, %100 : vector<2x256xf32>
    %c49_i32 = arith.constant 49 : i32
    %102 = tpu.dynamic_rotate %79 by %c49_i32 dim 1 : vector<2x256xf32>, i32 -> vector<2x256xf32>
    %103 = arith.andi %7, %52 : vector<1x256xi1>
    %cst_27 = arith.constant 0.000000e+00 : f32
    %104 = vector.shape_cast %103 : vector<1x256xi1> to vector<1x256xi1>
    %105 = vector.broadcast %104 : vector<1x256xi1> to vector<2x256xi1>
    %106 = vector.broadcast %cst_27 : f32 to vector<2x256xf32>
    %107 = arith.select %105, %102, %106 : vector<2x256xi1>, vector<2x256xf32>
    %108 = vector.extract_strided_slice %0 {offsets = [0, 2], sizes = [2, 1], strides = [1, 1]} : vector<2x50xf32> to vector<2x1xf32>
    %109 = vector.broadcast %108 : vector<2x1xf32> to vector<2x256xf32>
    %110 = arith.mulf %109, %107 : vector<2x256xf32>
    %111 = arith.addf %91, %110 : vector<2x256xf32>
    %c48_i32 = arith.constant 48 : i32
    %112 = tpu.dynamic_rotate %79 by %c48_i32 dim 1 : vector<2x256xf32>, i32 -> vector<2x256xf32>
    %113 = arith.andi %7, %57 : vector<1x256xi1>
    %cst_28 = arith.constant 0.000000e+00 : f32
    %114 = vector.shape_cast %113 : vector<1x256xi1> to vector<1x256xi1>
    %115 = vector.broadcast %114 : vector<1x256xi1> to vector<2x256xi1>
    %116 = vector.broadcast %cst_28 : f32 to vector<2x256xf32>
    %117 = arith.select %115, %112, %116 : vector<2x256xi1>, vector<2x256xf32>
    %118 = vector.extract_strided_slice %0 {offsets = [0, 3], sizes = [2, 1], strides = [1, 1]} : vector<2x50xf32> to vector<2x1xf32>
    %119 = vector.broadcast %118 : vector<2x1xf32> to vector<2x256xf32>
    %120 = arith.mulf %119, %117 : vector<2x256xf32>
    %121 = arith.addf %101, %120 : vector<2x256xf32>
    %c47_i32 = arith.constant 47 : i32
    %122 = tpu.dynamic_rotate %79 by %c47_i32 dim 1 : vector<2x256xf32>, i32 -> vector<2x256xf32>
    %123 = arith.andi %7, %62 : vector<1x256xi1>
    %cst_29 = arith.constant 0.000000e+00 : f32
    %124 = vector.shape_cast %123 : vector<1x256xi1> to vector<1x256xi1>
    %125 = vector.broadcast %124 : vector<1x256xi1> to vector<2x256xi1>
    %126 = vector.broadcast %cst_29 : f32 to vector<2x256xf32>
    %127 = arith.select %125, %122, %126 : vector<2x256xi1>, vector<2x256xf32>
    %128 = vector.extract_strided_slice %0 {offsets = [0, 4], sizes = [2, 1], strides = [1, 1]} : vector<2x50xf32> to vector<2x1xf32>
    %129 = vector.broadcast %128 : vector<2x1xf32> to vector<2x256xf32>
    %130 = arith.mulf %129, %127 : vector<2x256xf32>
    %131 = arith.addf %111, %130 : vector<2x256xf32>
    %c46_i32 = arith.constant 46 : i32
    %132 = tpu.dynamic_rotate %79 by %c46_i32 dim 1 : vector<2x256xf32>, i32 -> vector<2x256xf32>
    %133 = arith.andi %7, %67 : vector<1x256xi1>
    %cst_30 = arith.constant 0.000000e+00 : f32
    %134 = vector.shape_cast %133 : vector<1x256xi1> to vector<1x256xi1>
    %135 = vector.broadcast %134 : vector<1x256xi1> to vector<2x256xi1>
    %136 = vector.broadcast %cst_30 : f32 to vector<2x256xf32>
    %137 = arith.select %135, %132, %136 : vector<2x256xi1>, vector<2x256xf32>
    %138 = vector.extract_strided_slice %0 {offsets = [0, 5], sizes = [2, 1], strides = [1, 1]} : vector<2x50xf32> to vector<2x1xf32>
    %139 = vector.broadcast %138 : vector<2x1xf32> to vector<2x256xf32>
    %140 = arith.mulf %139, %137 : vector<2x256xf32>
    %141 = arith.addf %121, %140 : vector<2x256xf32>
    %c45_i32 = arith.constant 45 : i32
    %142 = tpu.dynamic_rotate %79 by %c45_i32 dim 1 : vector<2x256xf32>, i32 -> vector<2x256xf32>
    %143 = arith.andi %7, %72 : vector<1x256xi1>
    %cst_31 = arith.constant 0.000000e+00 : f32
    %144 = vector.shape_cast %143 : vector<1x256xi1> to vector<1x256xi1>
    %145 = vector.broadcast %144 : vector<1x256xi1> to vector<2x256xi1>
    %146 = vector.broadcast %cst_31 : f32 to vector<2x256xf32>
    %147 = arith.select %145, %142, %146 : vector<2x256xi1>, vector<2x256xf32>
    %148 = vector.extract_strided_slice %0 {offsets = [0, 6], sizes = [2, 1], strides = [1, 1]} : vector<2x50xf32> to vector<2x1xf32>
    %149 = vector.broadcast %148 : vector<2x1xf32> to vector<2x256xf32>
    %150 = arith.mulf %149, %147 : vector<2x256xf32>
    %151 = arith.addf %131, %150 : vector<2x256xf32>
    %c35_i32 = arith.constant 35 : i32
    %152 = tpu.dynamic_rotate %79 by %c35_i32 dim 1 : vector<2x256xf32>, i32 -> vector<2x256xf32>
    %153 = arith.andi %12, %42 : vector<1x256xi1>
    %cst_32 = arith.constant 0.000000e+00 : f32
    %154 = vector.shape_cast %153 : vector<1x256xi1> to vector<1x256xi1>
    %155 = vector.broadcast %154 : vector<1x256xi1> to vector<2x256xi1>
    %156 = vector.broadcast %cst_32 : f32 to vector<2x256xf32>
    %157 = arith.select %155, %152, %156 : vector<2x256xi1>, vector<2x256xf32>
    %158 = vector.extract_strided_slice %0 {offsets = [0, 7], sizes = [2, 1], strides = [1, 1]} : vector<2x50xf32> to vector<2x1xf32>
    %159 = vector.broadcast %158 : vector<2x1xf32> to vector<2x256xf32>
    %160 = arith.mulf %159, %157 : vector<2x256xf32>
    %161 = arith.addf %141, %160 : vector<2x256xf32>
    %c34_i32 = arith.constant 34 : i32
    %162 = tpu.dynamic_rotate %79 by %c34_i32 dim 1 : vector<2x256xf32>, i32 -> vector<2x256xf32>
    %163 = arith.andi %12, %47 : vector<1x256xi1>
    %cst_33 = arith.constant 0.000000e+00 : f32
    %164 = vector.shape_cast %163 : vector<1x256xi1> to vector<1x256xi1>
    %165 = vector.broadcast %164 : vector<1x256xi1> to vector<2x256xi1>
    %166 = vector.broadcast %cst_33 : f32 to vector<2x256xf32>
    %167 = arith.select %165, %162, %166 : vector<2x256xi1>, vector<2x256xf32>
    %168 = vector.extract_strided_slice %0 {offsets = [0, 8], sizes = [2, 1], strides = [1, 1]} : vector<2x50xf32> to vector<2x1xf32>
    %169 = vector.broadcast %168 : vector<2x1xf32> to vector<2x256xf32>
    %170 = arith.mulf %169, %167 : vector<2x256xf32>
    %171 = arith.addf %151, %170 : vector<2x256xf32>
    %c33_i32 = arith.constant 33 : i32
    %172 = tpu.dynamic_rotate %79 by %c33_i32 dim 1 : vector<2x256xf32>, i32 -> vector<2x256xf32>
    %173 = arith.andi %12, %52 : vector<1x256xi1>
    %cst_34 = arith.constant 0.000000e+00 : f32
    %174 = vector.shape_cast %173 : vector<1x256xi1> to vector<1x256xi1>
    %175 = vector.broadcast %174 : vector<1x256xi1> to vector<2x256xi1>
    %176 = vector.broadcast %cst_34 : f32 to vector<2x256xf32>
    %177 = arith.select %175, %172, %176 : vector<2x256xi1>, vector<2x256xf32>
    %178 = vector.extract_strided_slice %0 {offsets = [0, 9], sizes = [2, 1], strides = [1, 1]} : vector<2x50xf32> to vector<2x1xf32>
    %179 = vector.broadcast %178 : vector<2x1xf32> to vector<2x256xf32>
    %180 = arith.mulf %179, %177 : vector<2x256xf32>
    %181 = arith.addf %161, %180 : vector<2x256xf32>
    %c32_i32 = arith.constant 32 : i32
    %182 = tpu.dynamic_rotate %79 by %c32_i32 dim 1 : vector<2x256xf32>, i32 -> vector<2x256xf32>
    %183 = arith.andi %12, %57 : vector<1x256xi1>
    %cst_35 = arith.constant 0.000000e+00 : f32
    %184 = vector.shape_cast %183 : vector<1x256xi1> to vector<1x256xi1>
    %185 = vector.broadcast %184 : vector<1x256xi1> to vector<2x256xi1>
    %186 = vector.broadcast %cst_35 : f32 to vector<2x256xf32>
    %187 = arith.select %185, %182, %186 : vector<2x256xi1>, vector<2x256xf32>
    %188 = vector.extract_strided_slice %0 {offsets = [0, 10], sizes = [2, 1], strides = [1, 1]} : vector<2x50xf32> to vector<2x1xf32>
    %189 = vector.broadcast %188 : vector<2x1xf32> to vector<2x256xf32>
    %190 = arith.mulf %189, %187 : vector<2x256xf32>
    %191 = arith.addf %171, %190 : vector<2x256xf32>
    %c31_i32 = arith.constant 31 : i32
    %192 = tpu.dynamic_rotate %79 by %c31_i32 dim 1 : vector<2x256xf32>, i32 -> vector<2x256xf32>
    %193 = arith.andi %12, %62 : vector<1x256xi1>
    %cst_36 = arith.constant 0.000000e+00 : f32
    %194 = vector.shape_cast %193 : vector<1x256xi1> to vector<1x256xi1>
    %195 = vector.broadcast %194 : vector<1x256xi1> to vector<2x256xi1>
    %196 = vector.broadcast %cst_36 : f32 to vector<2x256xf32>
    %197 = arith.select %195, %192, %196 : vector<2x256xi1>, vector<2x256xf32>
    %198 = vector.extract_strided_slice %0 {offsets = [0, 11], sizes = [2, 1], strides = [1, 1]} : vector<2x50xf32> to vector<2x1xf32>
    %199 = vector.broadcast %198 : vector<2x1xf32> to vector<2x256xf32>
    %200 = arith.mulf %199, %197 : vector<2x256xf32>
    %201 = arith.addf %181, %200 : vector<2x256xf32>
    %c30_i32 = arith.constant 30 : i32
    %202 = tpu.dynamic_rotate %79 by %c30_i32 dim 1 : vector<2x256xf32>, i32 -> vector<2x256xf32>
    %203 = arith.andi %12, %67 : vector<1x256xi1>
    %cst_37 = arith.constant 0.000000e+00 : f32
    %204 = vector.shape_cast %203 : vector<1x256xi1> to vector<1x256xi1>
    %205 = vector.broadcast %204 : vector<1x256xi1> to vector<2x256xi1>
    %206 = vector.broadcast %cst_37 : f32 to vector<2x256xf32>
    %207 = arith.select %205, %202, %206 : vector<2x256xi1>, vector<2x256xf32>
    %208 = vector.extract_strided_slice %0 {offsets = [0, 12], sizes = [2, 1], strides = [1, 1]} : vector<2x50xf32> to vector<2x1xf32>
    %209 = vector.broadcast %208 : vector<2x1xf32> to vector<2x256xf32>
    %210 = arith.mulf %209, %207 : vector<2x256xf32>
    %211 = arith.addf %191, %210 : vector<2x256xf32>
    %c29_i32 = arith.constant 29 : i32
    %212 = tpu.dynamic_rotate %79 by %c29_i32 dim 1 : vector<2x256xf32>, i32 -> vector<2x256xf32>
    %213 = arith.andi %12, %72 : vector<1x256xi1>
    %cst_38 = arith.constant 0.000000e+00 : f32
    %214 = vector.shape_cast %213 : vector<1x256xi1> to vector<1x256xi1>
    %215 = vector.broadcast %214 : vector<1x256xi1> to vector<2x256xi1>
    %216 = vector.broadcast %cst_38 : f32 to vector<2x256xf32>
    %217 = arith.select %215, %212, %216 : vector<2x256xi1>, vector<2x256xf32>
    %218 = vector.extract_strided_slice %0 {offsets = [0, 13], sizes = [2, 1], strides = [1, 1]} : vector<2x50xf32> to vector<2x1xf32>
    %219 = vector.broadcast %218 : vector<2x1xf32> to vector<2x256xf32>
    %220 = arith.mulf %219, %217 : vector<2x256xf32>
    %221 = arith.addf %201, %220 : vector<2x256xf32>
    %c19_i32_39 = arith.constant 19 : i32
    %222 = tpu.dynamic_rotate %79 by %c19_i32_39 dim 1 : vector<2x256xf32>, i32 -> vector<2x256xf32>
    %223 = arith.andi %17, %42 : vector<1x256xi1>
    %cst_40 = arith.constant 0.000000e+00 : f32
    %224 = vector.shape_cast %223 : vector<1x256xi1> to vector<1x256xi1>
    %225 = vector.broadcast %224 : vector<1x256xi1> to vector<2x256xi1>
    %226 = vector.broadcast %cst_40 : f32 to vector<2x256xf32>
    %227 = arith.select %225, %222, %226 : vector<2x256xi1>, vector<2x256xf32>
    %228 = vector.extract_strided_slice %0 {offsets = [0, 14], sizes = [2, 1], strides = [1, 1]} : vector<2x50xf32> to vector<2x1xf32>
    %229 = vector.broadcast %228 : vector<2x1xf32> to vector<2x256xf32>
    %230 = arith.mulf %229, %227 : vector<2x256xf32>
    %231 = arith.addf %211, %230 : vector<2x256xf32>
    %c18_i32_41 = arith.constant 18 : i32
    %232 = tpu.dynamic_rotate %79 by %c18_i32_41 dim 1 : vector<2x256xf32>, i32 -> vector<2x256xf32>
    %233 = arith.andi %17, %47 : vector<1x256xi1>
    %cst_42 = arith.constant 0.000000e+00 : f32
    %234 = vector.shape_cast %233 : vector<1x256xi1> to vector<1x256xi1>
    %235 = vector.broadcast %234 : vector<1x256xi1> to vector<2x256xi1>
    %236 = vector.broadcast %cst_42 : f32 to vector<2x256xf32>
    %237 = arith.select %235, %232, %236 : vector<2x256xi1>, vector<2x256xf32>
    %238 = vector.extract_strided_slice %0 {offsets = [0, 15], sizes = [2, 1], strides = [1, 1]} : vector<2x50xf32> to vector<2x1xf32>
    %239 = vector.broadcast %238 : vector<2x1xf32> to vector<2x256xf32>
    %240 = arith.mulf %239, %237 : vector<2x256xf32>
    %241 = arith.addf %221, %240 : vector<2x256xf32>
    %c17_i32_43 = arith.constant 17 : i32
    %242 = tpu.dynamic_rotate %79 by %c17_i32_43 dim 1 : vector<2x256xf32>, i32 -> vector<2x256xf32>
    %243 = arith.andi %17, %52 : vector<1x256xi1>
    %cst_44 = arith.constant 0.000000e+00 : f32
    %244 = vector.shape_cast %243 : vector<1x256xi1> to vector<1x256xi1>
    %245 = vector.broadcast %244 : vector<1x256xi1> to vector<2x256xi1>
    %246 = vector.broadcast %cst_44 : f32 to vector<2x256xf32>
    %247 = arith.select %245, %242, %246 : vector<2x256xi1>, vector<2x256xf32>
    %248 = vector.extract_strided_slice %0 {offsets = [0, 16], sizes = [2, 1], strides = [1, 1]} : vector<2x50xf32> to vector<2x1xf32>
    %249 = vector.broadcast %248 : vector<2x1xf32> to vector<2x256xf32>
    %250 = arith.mulf %249, %247 : vector<2x256xf32>
    %251 = arith.addf %231, %250 : vector<2x256xf32>
    %c16_i32_45 = arith.constant 16 : i32
    %252 = tpu.dynamic_rotate %79 by %c16_i32_45 dim 1 : vector<2x256xf32>, i32 -> vector<2x256xf32>
    %253 = arith.andi %17, %57 : vector<1x256xi1>
    %cst_46 = arith.constant 0.000000e+00 : f32
    %254 = vector.shape_cast %253 : vector<1x256xi1> to vector<1x256xi1>
    %255 = vector.broadcast %254 : vector<1x256xi1> to vector<2x256xi1>
    %256 = vector.broadcast %cst_46 : f32 to vector<2x256xf32>
    %257 = arith.select %255, %252, %256 : vector<2x256xi1>, vector<2x256xf32>
    %258 = vector.extract_strided_slice %0 {offsets = [0, 17], sizes = [2, 1], strides = [1, 1]} : vector<2x50xf32> to vector<2x1xf32>
    %259 = vector.broadcast %258 : vector<2x1xf32> to vector<2x256xf32>
    %260 = arith.mulf %259, %257 : vector<2x256xf32>
    %261 = arith.addf %241, %260 : vector<2x256xf32>
    %c15_i32_47 = arith.constant 15 : i32
    %262 = tpu.dynamic_rotate %79 by %c15_i32_47 dim 1 : vector<2x256xf32>, i32 -> vector<2x256xf32>
    %263 = arith.andi %17, %62 : vector<1x256xi1>
    %cst_48 = arith.constant 0.000000e+00 : f32
    %264 = vector.shape_cast %263 : vector<1x256xi1> to vector<1x256xi1>
    %265 = vector.broadcast %264 : vector<1x256xi1> to vector<2x256xi1>
    %266 = vector.broadcast %cst_48 : f32 to vector<2x256xf32>
    %267 = arith.select %265, %262, %266 : vector<2x256xi1>, vector<2x256xf32>
    %268 = vector.extract_strided_slice %0 {offsets = [0, 18], sizes = [2, 1], strides = [1, 1]} : vector<2x50xf32> to vector<2x1xf32>
    %269 = vector.broadcast %268 : vector<2x1xf32> to vector<2x256xf32>
    %270 = arith.mulf %269, %267 : vector<2x256xf32>
    %271 = arith.addf %251, %270 : vector<2x256xf32>
    %c14_i32_49 = arith.constant 14 : i32
    %272 = tpu.dynamic_rotate %79 by %c14_i32_49 dim 1 : vector<2x256xf32>, i32 -> vector<2x256xf32>
    %273 = arith.andi %17, %67 : vector<1x256xi1>
    %cst_50 = arith.constant 0.000000e+00 : f32
    %274 = vector.shape_cast %273 : vector<1x256xi1> to vector<1x256xi1>
    %275 = vector.broadcast %274 : vector<1x256xi1> to vector<2x256xi1>
    %276 = vector.broadcast %cst_50 : f32 to vector<2x256xf32>
    %277 = arith.select %275, %272, %276 : vector<2x256xi1>, vector<2x256xf32>
    %278 = vector.extract_strided_slice %0 {offsets = [0, 19], sizes = [2, 1], strides = [1, 1]} : vector<2x50xf32> to vector<2x1xf32>
    %279 = vector.broadcast %278 : vector<2x1xf32> to vector<2x256xf32>
    %280 = arith.mulf %279, %277 : vector<2x256xf32>
    %281 = arith.addf %261, %280 : vector<2x256xf32>
    %c13_i32_51 = arith.constant 13 : i32
    %282 = tpu.dynamic_rotate %79 by %c13_i32_51 dim 1 : vector<2x256xf32>, i32 -> vector<2x256xf32>
    %283 = arith.andi %17, %72 : vector<1x256xi1>
    %cst_52 = arith.constant 0.000000e+00 : f32
    %284 = vector.shape_cast %283 : vector<1x256xi1> to vector<1x256xi1>
    %285 = vector.broadcast %284 : vector<1x256xi1> to vector<2x256xi1>
    %286 = vector.broadcast %cst_52 : f32 to vector<2x256xf32>
    %287 = arith.select %285, %282, %286 : vector<2x256xi1>, vector<2x256xf32>
    %288 = vector.extract_strided_slice %0 {offsets = [0, 20], sizes = [2, 1], strides = [1, 1]} : vector<2x50xf32> to vector<2x1xf32>
    %289 = vector.broadcast %288 : vector<2x1xf32> to vector<2x256xf32>
    %290 = arith.mulf %289, %287 : vector<2x256xf32>
    %291 = arith.addf %271, %290 : vector<2x256xf32>
    %c3_i32_53 = arith.constant 3 : i32
    %292 = tpu.dynamic_rotate %79 by %c3_i32_53 dim 1 : vector<2x256xf32>, i32 -> vector<2x256xf32>
    %293 = arith.andi %22, %42 : vector<1x256xi1>
    %cst_54 = arith.constant 0.000000e+00 : f32
    %294 = vector.shape_cast %293 : vector<1x256xi1> to vector<1x256xi1>
    %295 = vector.broadcast %294 : vector<1x256xi1> to vector<2x256xi1>
    %296 = vector.broadcast %cst_54 : f32 to vector<2x256xf32>
    %297 = arith.select %295, %292, %296 : vector<2x256xi1>, vector<2x256xf32>
    %298 = vector.extract_strided_slice %0 {offsets = [0, 21], sizes = [2, 1], strides = [1, 1]} : vector<2x50xf32> to vector<2x1xf32>
    %299 = vector.broadcast %298 : vector<2x1xf32> to vector<2x256xf32>
    %300 = arith.mulf %299, %297 : vector<2x256xf32>
    %301 = arith.addf %281, %300 : vector<2x256xf32>
    %c2_i32_55 = arith.constant 2 : i32
    %302 = tpu.dynamic_rotate %79 by %c2_i32_55 dim 1 : vector<2x256xf32>, i32 -> vector<2x256xf32>
    %303 = arith.andi %22, %47 : vector<1x256xi1>
    %cst_56 = arith.constant 0.000000e+00 : f32
    %304 = vector.shape_cast %303 : vector<1x256xi1> to vector<1x256xi1>
    %305 = vector.broadcast %304 : vector<1x256xi1> to vector<2x256xi1>
    %306 = vector.broadcast %cst_56 : f32 to vector<2x256xf32>
    %307 = arith.select %305, %302, %306 : vector<2x256xi1>, vector<2x256xf32>
    %308 = vector.extract_strided_slice %0 {offsets = [0, 22], sizes = [2, 1], strides = [1, 1]} : vector<2x50xf32> to vector<2x1xf32>
    %309 = vector.broadcast %308 : vector<2x1xf32> to vector<2x256xf32>
    %310 = arith.mulf %309, %307 : vector<2x256xf32>
    %311 = arith.addf %291, %310 : vector<2x256xf32>
    %c1_i32_57 = arith.constant 1 : i32
    %312 = tpu.dynamic_rotate %79 by %c1_i32_57 dim 1 : vector<2x256xf32>, i32 -> vector<2x256xf32>
    %313 = arith.andi %22, %52 : vector<1x256xi1>
    %cst_58 = arith.constant 0.000000e+00 : f32
    %314 = vector.shape_cast %313 : vector<1x256xi1> to vector<1x256xi1>
    %315 = vector.broadcast %314 : vector<1x256xi1> to vector<2x256xi1>
    %316 = vector.broadcast %cst_58 : f32 to vector<2x256xf32>
    %317 = arith.select %315, %312, %316 : vector<2x256xi1>, vector<2x256xf32>
    %318 = vector.extract_strided_slice %0 {offsets = [0, 23], sizes = [2, 1], strides = [1, 1]} : vector<2x50xf32> to vector<2x1xf32>
    %319 = vector.broadcast %318 : vector<2x1xf32> to vector<2x256xf32>
    %320 = arith.mulf %319, %317 : vector<2x256xf32>
    %321 = arith.addf %301, %320 : vector<2x256xf32>
    %322 = vector.extract_strided_slice %0 {offsets = [0, 24], sizes = [2, 1], strides = [1, 1]} : vector<2x50xf32> to vector<2x1xf32>
    %323 = vector.broadcast %322 : vector<2x1xf32> to vector<2x256xf32>
    %324 = arith.mulf %323, %79 : vector<2x256xf32>
    %325 = arith.addf %311, %324 : vector<2x256xf32>
    %c255_i32 = arith.constant 255 : i32
    %326 = tpu.dynamic_rotate %79 by %c255_i32 dim 1 : vector<2x256xf32>, i32 -> vector<2x256xf32>
    %327 = arith.andi %22, %62 : vector<1x256xi1>
    %cst_59 = arith.constant 0.000000e+00 : f32
    %328 = vector.shape_cast %327 : vector<1x256xi1> to vector<1x256xi1>
    %329 = vector.broadcast %328 : vector<1x256xi1> to vector<2x256xi1>
    %330 = vector.broadcast %cst_59 : f32 to vector<2x256xf32>
    %331 = arith.select %329, %326, %330 : vector<2x256xi1>, vector<2x256xf32>
    %332 = vector.extract_strided_slice %0 {offsets = [0, 25], sizes = [2, 1], strides = [1, 1]} : vector<2x50xf32> to vector<2x1xf32>
    %333 = vector.broadcast %332 : vector<2x1xf32> to vector<2x256xf32>
    %334 = arith.mulf %333, %331 : vector<2x256xf32>
    %335 = arith.addf %321, %334 : vector<2x256xf32>
    %c254_i32 = arith.constant 254 : i32
    %336 = tpu.dynamic_rotate %79 by %c254_i32 dim 1 : vector<2x256xf32>, i32 -> vector<2x256xf32>
    %337 = arith.andi %22, %67 : vector<1x256xi1>
    %cst_60 = arith.constant 0.000000e+00 : f32
    %338 = vector.shape_cast %337 : vector<1x256xi1> to vector<1x256xi1>
    %339 = vector.broadcast %338 : vector<1x256xi1> to vector<2x256xi1>
    %340 = vector.broadcast %cst_60 : f32 to vector<2x256xf32>
    %341 = arith.select %339, %336, %340 : vector<2x256xi1>, vector<2x256xf32>
    %342 = vector.extract_strided_slice %0 {offsets = [0, 26], sizes = [2, 1], strides = [1, 1]} : vector<2x50xf32> to vector<2x1xf32>
    %343 = vector.broadcast %342 : vector<2x1xf32> to vector<2x256xf32>
    %344 = arith.mulf %343, %341 : vector<2x256xf32>
    %345 = arith.addf %325, %344 : vector<2x256xf32>
    %c253_i32 = arith.constant 253 : i32
    %346 = tpu.dynamic_rotate %79 by %c253_i32 dim 1 : vector<2x256xf32>, i32 -> vector<2x256xf32>
    %347 = arith.andi %22, %72 : vector<1x256xi1>
    %cst_61 = arith.constant 0.000000e+00 : f32
    %348 = vector.shape_cast %347 : vector<1x256xi1> to vector<1x256xi1>
    %349 = vector.broadcast %348 : vector<1x256xi1> to vector<2x256xi1>
    %350 = vector.broadcast %cst_61 : f32 to vector<2x256xf32>
    %351 = arith.select %349, %346, %350 : vector<2x256xi1>, vector<2x256xf32>
    %352 = vector.extract_strided_slice %0 {offsets = [0, 27], sizes = [2, 1], strides = [1, 1]} : vector<2x50xf32> to vector<2x1xf32>
    %353 = vector.broadcast %352 : vector<2x1xf32> to vector<2x256xf32>
    %354 = arith.mulf %353, %351 : vector<2x256xf32>
    %355 = arith.addf %335, %354 : vector<2x256xf32>
    %c243_i32 = arith.constant 243 : i32
    %356 = tpu.dynamic_rotate %79 by %c243_i32 dim 1 : vector<2x256xf32>, i32 -> vector<2x256xf32>
    %357 = arith.andi %27, %42 : vector<1x256xi1>
    %cst_62 = arith.constant 0.000000e+00 : f32
    %358 = vector.shape_cast %357 : vector<1x256xi1> to vector<1x256xi1>
    %359 = vector.broadcast %358 : vector<1x256xi1> to vector<2x256xi1>
    %360 = vector.broadcast %cst_62 : f32 to vector<2x256xf32>
    %361 = arith.select %359, %356, %360 : vector<2x256xi1>, vector<2x256xf32>
    %362 = vector.extract_strided_slice %0 {offsets = [0, 28], sizes = [2, 1], strides = [1, 1]} : vector<2x50xf32> to vector<2x1xf32>
    %363 = vector.broadcast %362 : vector<2x1xf32> to vector<2x256xf32>
    %364 = arith.mulf %363, %361 : vector<2x256xf32>
    %365 = arith.addf %345, %364 : vector<2x256xf32>
    %c242_i32 = arith.constant 242 : i32
    %366 = tpu.dynamic_rotate %79 by %c242_i32 dim 1 : vector<2x256xf32>, i32 -> vector<2x256xf32>
    %367 = arith.andi %27, %47 : vector<1x256xi1>
    %cst_63 = arith.constant 0.000000e+00 : f32
    %368 = vector.shape_cast %367 : vector<1x256xi1> to vector<1x256xi1>
    %369 = vector.broadcast %368 : vector<1x256xi1> to vector<2x256xi1>
    %370 = vector.broadcast %cst_63 : f32 to vector<2x256xf32>
    %371 = arith.select %369, %366, %370 : vector<2x256xi1>, vector<2x256xf32>
    %372 = vector.extract_strided_slice %0 {offsets = [0, 29], sizes = [2, 1], strides = [1, 1]} : vector<2x50xf32> to vector<2x1xf32>
    %373 = vector.broadcast %372 : vector<2x1xf32> to vector<2x256xf32>
    %374 = arith.mulf %373, %371 : vector<2x256xf32>
    %375 = arith.addf %355, %374 : vector<2x256xf32>
    %c241_i32 = arith.constant 241 : i32
    %376 = tpu.dynamic_rotate %79 by %c241_i32 dim 1 : vector<2x256xf32>, i32 -> vector<2x256xf32>
    %377 = arith.andi %27, %52 : vector<1x256xi1>
    %cst_64 = arith.constant 0.000000e+00 : f32
    %378 = vector.shape_cast %377 : vector<1x256xi1> to vector<1x256xi1>
    %379 = vector.broadcast %378 : vector<1x256xi1> to vector<2x256xi1>
    %380 = vector.broadcast %cst_64 : f32 to vector<2x256xf32>
    %381 = arith.select %379, %376, %380 : vector<2x256xi1>, vector<2x256xf32>
    %382 = vector.extract_strided_slice %0 {offsets = [0, 30], sizes = [2, 1], strides = [1, 1]} : vector<2x50xf32> to vector<2x1xf32>
    %383 = vector.broadcast %382 : vector<2x1xf32> to vector<2x256xf32>
    %384 = arith.mulf %383, %381 : vector<2x256xf32>
    %385 = arith.addf %365, %384 : vector<2x256xf32>
    %c240_i32 = arith.constant 240 : i32
    %386 = tpu.dynamic_rotate %79 by %c240_i32 dim 1 : vector<2x256xf32>, i32 -> vector<2x256xf32>
    %387 = arith.andi %27, %57 : vector<1x256xi1>
    %cst_65 = arith.constant 0.000000e+00 : f32
    %388 = vector.shape_cast %387 : vector<1x256xi1> to vector<1x256xi1>
    %389 = vector.broadcast %388 : vector<1x256xi1> to vector<2x256xi1>
    %390 = vector.broadcast %cst_65 : f32 to vector<2x256xf32>
    %391 = arith.select %389, %386, %390 : vector<2x256xi1>, vector<2x256xf32>
    %392 = vector.extract_strided_slice %0 {offsets = [0, 31], sizes = [2, 1], strides = [1, 1]} : vector<2x50xf32> to vector<2x1xf32>
    %393 = vector.broadcast %392 : vector<2x1xf32> to vector<2x256xf32>
    %394 = arith.mulf %393, %391 : vector<2x256xf32>
    %395 = arith.addf %375, %394 : vector<2x256xf32>
    %c239_i32 = arith.constant 239 : i32
    %396 = tpu.dynamic_rotate %79 by %c239_i32 dim 1 : vector<2x256xf32>, i32 -> vector<2x256xf32>
    %397 = arith.andi %27, %62 : vector<1x256xi1>
    %cst_66 = arith.constant 0.000000e+00 : f32
    %398 = vector.shape_cast %397 : vector<1x256xi1> to vector<1x256xi1>
    %399 = vector.broadcast %398 : vector<1x256xi1> to vector<2x256xi1>
    %400 = vector.broadcast %cst_66 : f32 to vector<2x256xf32>
    %401 = arith.select %399, %396, %400 : vector<2x256xi1>, vector<2x256xf32>
    %402 = vector.extract_strided_slice %0 {offsets = [0, 32], sizes = [2, 1], strides = [1, 1]} : vector<2x50xf32> to vector<2x1xf32>
    %403 = vector.broadcast %402 : vector<2x1xf32> to vector<2x256xf32>
    %404 = arith.mulf %403, %401 : vector<2x256xf32>
    %405 = arith.addf %385, %404 : vector<2x256xf32>
    %c238_i32 = arith.constant 238 : i32
    %406 = tpu.dynamic_rotate %79 by %c238_i32 dim 1 : vector<2x256xf32>, i32 -> vector<2x256xf32>
    %407 = arith.andi %27, %67 : vector<1x256xi1>
    %cst_67 = arith.constant 0.000000e+00 : f32
    %408 = vector.shape_cast %407 : vector<1x256xi1> to vector<1x256xi1>
    %409 = vector.broadcast %408 : vector<1x256xi1> to vector<2x256xi1>
    %410 = vector.broadcast %cst_67 : f32 to vector<2x256xf32>
    %411 = arith.select %409, %406, %410 : vector<2x256xi1>, vector<2x256xf32>
    %412 = vector.extract_strided_slice %0 {offsets = [0, 33], sizes = [2, 1], strides = [1, 1]} : vector<2x50xf32> to vector<2x1xf32>
    %413 = vector.broadcast %412 : vector<2x1xf32> to vector<2x256xf32>
    %414 = arith.mulf %413, %411 : vector<2x256xf32>
    %415 = arith.addf %395, %414 : vector<2x256xf32>
    %c237_i32 = arith.constant 237 : i32
    %416 = tpu.dynamic_rotate %79 by %c237_i32 dim 1 : vector<2x256xf32>, i32 -> vector<2x256xf32>
    %417 = arith.andi %27, %72 : vector<1x256xi1>
    %cst_68 = arith.constant 0.000000e+00 : f32
    %418 = vector.shape_cast %417 : vector<1x256xi1> to vector<1x256xi1>
    %419 = vector.broadcast %418 : vector<1x256xi1> to vector<2x256xi1>
    %420 = vector.broadcast %cst_68 : f32 to vector<2x256xf32>
    %421 = arith.select %419, %416, %420 : vector<2x256xi1>, vector<2x256xf32>
    %422 = vector.extract_strided_slice %0 {offsets = [0, 34], sizes = [2, 1], strides = [1, 1]} : vector<2x50xf32> to vector<2x1xf32>
    %423 = vector.broadcast %422 : vector<2x1xf32> to vector<2x256xf32>
    %424 = arith.mulf %423, %421 : vector<2x256xf32>
    %425 = arith.addf %405, %424 : vector<2x256xf32>
    %c227_i32 = arith.constant 227 : i32
    %426 = tpu.dynamic_rotate %79 by %c227_i32 dim 1 : vector<2x256xf32>, i32 -> vector<2x256xf32>
    %427 = arith.andi %32, %42 : vector<1x256xi1>
    %cst_69 = arith.constant 0.000000e+00 : f32
    %428 = vector.shape_cast %427 : vector<1x256xi1> to vector<1x256xi1>
    %429 = vector.broadcast %428 : vector<1x256xi1> to vector<2x256xi1>
    %430 = vector.broadcast %cst_69 : f32 to vector<2x256xf32>
    %431 = arith.select %429, %426, %430 : vector<2x256xi1>, vector<2x256xf32>
    %432 = vector.extract_strided_slice %0 {offsets = [0, 35], sizes = [2, 1], strides = [1, 1]} : vector<2x50xf32> to vector<2x1xf32>
    %433 = vector.broadcast %432 : vector<2x1xf32> to vector<2x256xf32>
    %434 = arith.mulf %433, %431 : vector<2x256xf32>
    %435 = arith.addf %415, %434 : vector<2x256xf32>
    %c226_i32 = arith.constant 226 : i32
    %436 = tpu.dynamic_rotate %79 by %c226_i32 dim 1 : vector<2x256xf32>, i32 -> vector<2x256xf32>
    %437 = arith.andi %32, %47 : vector<1x256xi1>
    %cst_70 = arith.constant 0.000000e+00 : f32
    %438 = vector.shape_cast %437 : vector<1x256xi1> to vector<1x256xi1>
    %439 = vector.broadcast %438 : vector<1x256xi1> to vector<2x256xi1>
    %440 = vector.broadcast %cst_70 : f32 to vector<2x256xf32>
    %441 = arith.select %439, %436, %440 : vector<2x256xi1>, vector<2x256xf32>
    %442 = vector.extract_strided_slice %0 {offsets = [0, 36], sizes = [2, 1], strides = [1, 1]} : vector<2x50xf32> to vector<2x1xf32>
    %443 = vector.broadcast %442 : vector<2x1xf32> to vector<2x256xf32>
    %444 = arith.mulf %443, %441 : vector<2x256xf32>
    %445 = arith.addf %425, %444 : vector<2x256xf32>
    %c225_i32 = arith.constant 225 : i32
    %446 = tpu.dynamic_rotate %79 by %c225_i32 dim 1 : vector<2x256xf32>, i32 -> vector<2x256xf32>
    %447 = arith.andi %32, %52 : vector<1x256xi1>
    %cst_71 = arith.constant 0.000000e+00 : f32
    %448 = vector.shape_cast %447 : vector<1x256xi1> to vector<1x256xi1>
    %449 = vector.broadcast %448 : vector<1x256xi1> to vector<2x256xi1>
    %450 = vector.broadcast %cst_71 : f32 to vector<2x256xf32>
    %451 = arith.select %449, %446, %450 : vector<2x256xi1>, vector<2x256xf32>
    %452 = vector.extract_strided_slice %0 {offsets = [0, 37], sizes = [2, 1], strides = [1, 1]} : vector<2x50xf32> to vector<2x1xf32>
    %453 = vector.broadcast %452 : vector<2x1xf32> to vector<2x256xf32>
    %454 = arith.mulf %453, %451 : vector<2x256xf32>
    %455 = arith.addf %435, %454 : vector<2x256xf32>
    %c224_i32 = arith.constant 224 : i32
    %456 = tpu.dynamic_rotate %79 by %c224_i32 dim 1 : vector<2x256xf32>, i32 -> vector<2x256xf32>
    %457 = arith.andi %32, %57 : vector<1x256xi1>
    %cst_72 = arith.constant 0.000000e+00 : f32
    %458 = vector.shape_cast %457 : vector<1x256xi1> to vector<1x256xi1>
    %459 = vector.broadcast %458 : vector<1x256xi1> to vector<2x256xi1>
    %460 = vector.broadcast %cst_72 : f32 to vector<2x256xf32>
    %461 = arith.select %459, %456, %460 : vector<2x256xi1>, vector<2x256xf32>
    %462 = vector.extract_strided_slice %0 {offsets = [0, 38], sizes = [2, 1], strides = [1, 1]} : vector<2x50xf32> to vector<2x1xf32>
    %463 = vector.broadcast %462 : vector<2x1xf32> to vector<2x256xf32>
    %464 = arith.mulf %463, %461 : vector<2x256xf32>
    %465 = arith.addf %445, %464 : vector<2x256xf32>
    %c223_i32 = arith.constant 223 : i32
    %466 = tpu.dynamic_rotate %79 by %c223_i32 dim 1 : vector<2x256xf32>, i32 -> vector<2x256xf32>
    %467 = arith.andi %32, %62 : vector<1x256xi1>
    %cst_73 = arith.constant 0.000000e+00 : f32
    %468 = vector.shape_cast %467 : vector<1x256xi1> to vector<1x256xi1>
    %469 = vector.broadcast %468 : vector<1x256xi1> to vector<2x256xi1>
    %470 = vector.broadcast %cst_73 : f32 to vector<2x256xf32>
    %471 = arith.select %469, %466, %470 : vector<2x256xi1>, vector<2x256xf32>
    %472 = vector.extract_strided_slice %0 {offsets = [0, 39], sizes = [2, 1], strides = [1, 1]} : vector<2x50xf32> to vector<2x1xf32>
    %473 = vector.broadcast %472 : vector<2x1xf32> to vector<2x256xf32>
    %474 = arith.mulf %473, %471 : vector<2x256xf32>
    %475 = arith.addf %455, %474 : vector<2x256xf32>
    %c222_i32 = arith.constant 222 : i32
    %476 = tpu.dynamic_rotate %79 by %c222_i32 dim 1 : vector<2x256xf32>, i32 -> vector<2x256xf32>
    %477 = arith.andi %32, %67 : vector<1x256xi1>
    %cst_74 = arith.constant 0.000000e+00 : f32
    %478 = vector.shape_cast %477 : vector<1x256xi1> to vector<1x256xi1>
    %479 = vector.broadcast %478 : vector<1x256xi1> to vector<2x256xi1>
    %480 = vector.broadcast %cst_74 : f32 to vector<2x256xf32>
    %481 = arith.select %479, %476, %480 : vector<2x256xi1>, vector<2x256xf32>
    %482 = vector.extract_strided_slice %0 {offsets = [0, 40], sizes = [2, 1], strides = [1, 1]} : vector<2x50xf32> to vector<2x1xf32>
    %483 = vector.broadcast %482 : vector<2x1xf32> to vector<2x256xf32>
    %484 = arith.mulf %483, %481 : vector<2x256xf32>
    %485 = arith.addf %465, %484 : vector<2x256xf32>
    %c221_i32 = arith.constant 221 : i32
    %486 = tpu.dynamic_rotate %79 by %c221_i32 dim 1 : vector<2x256xf32>, i32 -> vector<2x256xf32>
    %487 = arith.andi %32, %72 : vector<1x256xi1>
    %cst_75 = arith.constant 0.000000e+00 : f32
    %488 = vector.shape_cast %487 : vector<1x256xi1> to vector<1x256xi1>
    %489 = vector.broadcast %488 : vector<1x256xi1> to vector<2x256xi1>
    %490 = vector.broadcast %cst_75 : f32 to vector<2x256xf32>
    %491 = arith.select %489, %486, %490 : vector<2x256xi1>, vector<2x256xf32>
    %492 = vector.extract_strided_slice %0 {offsets = [0, 41], sizes = [2, 1], strides = [1, 1]} : vector<2x50xf32> to vector<2x1xf32>
    %493 = vector.broadcast %492 : vector<2x1xf32> to vector<2x256xf32>
    %494 = arith.mulf %493, %491 : vector<2x256xf32>
    %495 = arith.addf %475, %494 : vector<2x256xf32>
    %c211_i32 = arith.constant 211 : i32
    %496 = tpu.dynamic_rotate %79 by %c211_i32 dim 1 : vector<2x256xf32>, i32 -> vector<2x256xf32>
    %497 = arith.andi %37, %42 : vector<1x256xi1>
    %cst_76 = arith.constant 0.000000e+00 : f32
    %498 = vector.shape_cast %497 : vector<1x256xi1> to vector<1x256xi1>
    %499 = vector.broadcast %498 : vector<1x256xi1> to vector<2x256xi1>
    %500 = vector.broadcast %cst_76 : f32 to vector<2x256xf32>
    %501 = arith.select %499, %496, %500 : vector<2x256xi1>, vector<2x256xf32>
    %502 = vector.extract_strided_slice %0 {offsets = [0, 42], sizes = [2, 1], strides = [1, 1]} : vector<2x50xf32> to vector<2x1xf32>
    %503 = vector.broadcast %502 : vector<2x1xf32> to vector<2x256xf32>
    %504 = arith.mulf %503, %501 : vector<2x256xf32>
    %505 = arith.addf %485, %504 : vector<2x256xf32>
    %c210_i32 = arith.constant 210 : i32
    %506 = tpu.dynamic_rotate %79 by %c210_i32 dim 1 : vector<2x256xf32>, i32 -> vector<2x256xf32>
    %507 = arith.andi %37, %47 : vector<1x256xi1>
    %cst_77 = arith.constant 0.000000e+00 : f32
    %508 = vector.shape_cast %507 : vector<1x256xi1> to vector<1x256xi1>
    %509 = vector.broadcast %508 : vector<1x256xi1> to vector<2x256xi1>
    %510 = vector.broadcast %cst_77 : f32 to vector<2x256xf32>
    %511 = arith.select %509, %506, %510 : vector<2x256xi1>, vector<2x256xf32>
    %512 = vector.extract_strided_slice %0 {offsets = [0, 43], sizes = [2, 1], strides = [1, 1]} : vector<2x50xf32> to vector<2x1xf32>
    %513 = vector.broadcast %512 : vector<2x1xf32> to vector<2x256xf32>
    %514 = arith.mulf %513, %511 : vector<2x256xf32>
    %515 = arith.addf %495, %514 : vector<2x256xf32>
    %c209_i32 = arith.constant 209 : i32
    %516 = tpu.dynamic_rotate %79 by %c209_i32 dim 1 : vector<2x256xf32>, i32 -> vector<2x256xf32>
    %517 = arith.andi %37, %52 : vector<1x256xi1>
    %cst_78 = arith.constant 0.000000e+00 : f32
    %518 = vector.shape_cast %517 : vector<1x256xi1> to vector<1x256xi1>
    %519 = vector.broadcast %518 : vector<1x256xi1> to vector<2x256xi1>
    %520 = vector.broadcast %cst_78 : f32 to vector<2x256xf32>
    %521 = arith.select %519, %516, %520 : vector<2x256xi1>, vector<2x256xf32>
    %522 = vector.extract_strided_slice %0 {offsets = [0, 44], sizes = [2, 1], strides = [1, 1]} : vector<2x50xf32> to vector<2x1xf32>
    %523 = vector.broadcast %522 : vector<2x1xf32> to vector<2x256xf32>
    %524 = arith.mulf %523, %521 : vector<2x256xf32>
    %525 = arith.addf %505, %524 : vector<2x256xf32>
    %c208_i32 = arith.constant 208 : i32
    %526 = tpu.dynamic_rotate %79 by %c208_i32 dim 1 : vector<2x256xf32>, i32 -> vector<2x256xf32>
    %527 = arith.andi %37, %57 : vector<1x256xi1>
    %cst_79 = arith.constant 0.000000e+00 : f32
    %528 = vector.shape_cast %527 : vector<1x256xi1> to vector<1x256xi1>
    %529 = vector.broadcast %528 : vector<1x256xi1> to vector<2x256xi1>
    %530 = vector.broadcast %cst_79 : f32 to vector<2x256xf32>
    %531 = arith.select %529, %526, %530 : vector<2x256xi1>, vector<2x256xf32>
    %532 = vector.extract_strided_slice %0 {offsets = [0, 45], sizes = [2, 1], strides = [1, 1]} : vector<2x50xf32> to vector<2x1xf32>
    %533 = vector.broadcast %532 : vector<2x1xf32> to vector<2x256xf32>
    %534 = arith.mulf %533, %531 : vector<2x256xf32>
    %535 = arith.addf %515, %534 : vector<2x256xf32>
    %c207_i32 = arith.constant 207 : i32
    %536 = tpu.dynamic_rotate %79 by %c207_i32 dim 1 : vector<2x256xf32>, i32 -> vector<2x256xf32>
    %537 = arith.andi %37, %62 : vector<1x256xi1>
    %cst_80 = arith.constant 0.000000e+00 : f32
    %538 = vector.shape_cast %537 : vector<1x256xi1> to vector<1x256xi1>
    %539 = vector.broadcast %538 : vector<1x256xi1> to vector<2x256xi1>
    %540 = vector.broadcast %cst_80 : f32 to vector<2x256xf32>
    %541 = arith.select %539, %536, %540 : vector<2x256xi1>, vector<2x256xf32>
    %542 = vector.extract_strided_slice %0 {offsets = [0, 46], sizes = [2, 1], strides = [1, 1]} : vector<2x50xf32> to vector<2x1xf32>
    %543 = vector.broadcast %542 : vector<2x1xf32> to vector<2x256xf32>
    %544 = arith.mulf %543, %541 : vector<2x256xf32>
    %545 = arith.addf %525, %544 : vector<2x256xf32>
    %c206_i32 = arith.constant 206 : i32
    %546 = tpu.dynamic_rotate %79 by %c206_i32 dim 1 : vector<2x256xf32>, i32 -> vector<2x256xf32>
    %547 = arith.andi %37, %67 : vector<1x256xi1>
    %cst_81 = arith.constant 0.000000e+00 : f32
    %548 = vector.shape_cast %547 : vector<1x256xi1> to vector<1x256xi1>
    %549 = vector.broadcast %548 : vector<1x256xi1> to vector<2x256xi1>
    %550 = vector.broadcast %cst_81 : f32 to vector<2x256xf32>
    %551 = arith.select %549, %546, %550 : vector<2x256xi1>, vector<2x256xf32>
    %552 = vector.extract_strided_slice %0 {offsets = [0, 47], sizes = [2, 1], strides = [1, 1]} : vector<2x50xf32> to vector<2x1xf32>
    %553 = vector.broadcast %552 : vector<2x1xf32> to vector<2x256xf32>
    %554 = arith.mulf %553, %551 : vector<2x256xf32>
    %555 = arith.addf %535, %554 : vector<2x256xf32>
    %c205_i32 = arith.constant 205 : i32
    %556 = tpu.dynamic_rotate %79 by %c205_i32 dim 1 : vector<2x256xf32>, i32 -> vector<2x256xf32>
    %557 = arith.andi %37, %72 : vector<1x256xi1>
    %cst_82 = arith.constant 0.000000e+00 : f32
    %558 = vector.shape_cast %557 : vector<1x256xi1> to vector<1x256xi1>
    %559 = vector.broadcast %558 : vector<1x256xi1> to vector<2x256xi1>
    %560 = vector.broadcast %cst_82 : f32 to vector<2x256xf32>
    %561 = arith.select %559, %556, %560 : vector<2x256xi1>, vector<2x256xf32>
    %562 = vector.extract_strided_slice %0 {offsets = [0, 48], sizes = [2, 1], strides = [1, 1]} : vector<2x50xf32> to vector<2x1xf32>
    %563 = vector.broadcast %562 : vector<2x1xf32> to vector<2x256xf32>
    %564 = arith.mulf %563, %561 : vector<2x256xf32>
    %565 = arith.addf %545, %564 : vector<2x256xf32>
    %566 = arith.addf %565, %555 : vector<2x256xf32>
    %567 = vector.extract_strided_slice %566 {offsets = [0, 0], sizes = [1, 256], strides = [1, 1]} : vector<2x256xf32> to vector<1x256xf32>
    %568 = vector.extract_strided_slice %566 {offsets = [1, 0], sizes = [1, 256], strides = [1, 1]} : vector<2x256xf32> to vector<1x256xf32>
    %569 = arith.addf %567, %568 : vector<1x256xf32>
    %570 = vector.extract_strided_slice %0 {offsets = [0, 49], sizes = [1, 1], strides = [1, 1]} : vector<2x50xf32> to vector<1x1xf32>
    %571 = vector.broadcast %570 : vector<1x1xf32> to vector<1x256xf32>
    %572 = arith.addf %569, %571 : vector<1x256xf32>
    %573 = arith.negf %572 : vector<1x256xf32>
    %574 = math.exp %573 : vector<1x256xf32>
    %cst_83 = arith.constant 1.000000e+00 : f32
    %575 = vector.broadcast %cst_83 : f32 to vector<1x256xf32>
    %576 = arith.addf %575, %574 : vector<1x256xf32>
    %577 = arith.divf %575, %576 : vector<1x256xf32>
    %c0_84 = arith.constant 0 : index
    %c0_85 = arith.constant 0 : index
    %c0_86 = arith.constant 0 : index
    %578 = vector.load %arg1[%c0_84, %c0_85, %c0_86] : memref<1x4x256xf32, #tpu.memory_space<vmem>>, vector<1x4x256xf32>
    %579 = vector.shape_cast %578 : vector<1x4x256xf32> to vector<4x256xf32>
    %580 = vector.broadcast %577 : vector<1x256xf32> to vector<4x256xf32>
    %581 = arith.mulf %579, %580 : vector<4x256xf32>
    %c0_87 = arith.constant 0 : index
    %c0_88 = arith.constant 0 : index
    %c0_89 = arith.constant 0 : index
    %582 = vector.load %arg5[%c0_87, %c0_88, %c0_89] : memref<1x4x256xf32, #tpu.memory_space<vmem>>, vector<1x4x256xf32>
    %583 = vector.shape_cast %582 : vector<1x4x256xf32> to vector<4x256xf32>
    %584 = vector.shape_cast %581 : vector<4x256xf32> to vector<1x4x256xf32>
    tpu.vector_store %arg5[%c0_87, %c0_88, %c0_89], %584 {strides = array<i32>} : memref<1x4x256xf32, #tpu.memory_space<vmem>>, vector<1x4x256xf32>,
    return
  }
  func.func @transform_0(%arg0: i32) -> (i32, i32, i32) {
    %c0_i32 = arith.constant 0 : i32
    %c0_i32_0 = arith.constant 0 : i32
    %c0_i32_1 = arith.constant 0 : i32
    return %arg0, %c0_i32, %c0_i32_0 : i32, i32, i32
  }
  func.func @transform_1(%arg0: i32) -> (i32, i32) {
    %c0_i32 = arith.constant 0 : i32
    %c0_i32_0 = arith.constant 0 : i32
    %c0_i32_1 = arith.constant 0 : i32
    return %c0_i32, %c0_i32_0 : i32, i32
  }
  func.func @transform_2(%arg0: i32) -> (i32, i32) {
    %c0_i32 = arith.constant 0 : i32
    %c0_i32_0 = arith.constant 0 : i32
    %c0_i32_1 = arith.constant 0 : i32
    return %c0_i32, %c0_i32_0 : i32, i32
  }
  func.func @transform_3(%arg0: i32) -> (i32, i32) {
    %c0_i32 = arith.constant 0 : i32
    %c0_i32_0 = arith.constant 0 : i32
    %c0_i32_1 = arith.constant 0 : i32
    return %c0_i32, %c0_i32_0 : i32, i32
  }
  func.func @transform_4(%arg0: i32) -> (i32, i32, i32) {
    %c0_i32 = arith.constant 0 : i32
    %c0_i32_0 = arith.constant 0 : i32
    %c0_i32_1 = arith.constant 0 : i32
    return %arg0, %c0_i32, %c0_i32_0 : i32, i32, i32
  }
}

</mosaic_0001>

<llo_original>
// kernel: _lambda_.1
$region0: #{_lambda_.1}
  #allocation0 [shape = 'u32[]', space=smem, size = 0x4, offset = 0x4, fixed_abs, tag = 'smem constant byte address 0x4 - core index']
  #allocation1 [shape = 'u32[144,128]{1,0:T(1,128)}', space=vmem, size = 0x12000, scoped, tag = 'internal scratch']
  %s0 = inlined_call_operand.vmem [shape: f32[2,4,256], index: 0, kind: input, shape index: {}]
  %s1 = inlined_call_operand.vmem [shape: f32[2,50], index: 1, kind: input, shape index: {}]
  %s2 = inlined_call_operand.vmem [shape: s32[1,256], index: 2, kind: input, shape index: {}]
  %s3 = inlined_call_operand.vmem [shape: s32[1,256], index: 3, kind: input, shape index: {}]
  %s4 = inlined_call_operand.vmem [shape: f32[2,4,256], index: 4, kind: output, shape index: {}]
  %s5 = sld [smem:[#allocation0]]
  $region49: #{_lambda_.1} parent=0
    _
  %s7 = ssub.s32 1, %s5
  %s8 = scalar_select 0, %s7, %s5
  loop: start=0, step=1, limit=4
  $region2: #{_lambda_.1} parent=0 // loop_pre_header
    _
  $region3: #{_lambda_.1} parent=0 // loop_header
    %s10 = sphi 0, %s14
    %p11 = scmp.ge.s32.totalorder %s10, 4
    %s20 = sphi 0, %s22
    %s23 = sphi 0, %s20
    %s24 = sphi 0, %s23
    %s40 = sphi 0, %s24
    %s44 = sphi 0, %s44
    %s46 = sphi 0, %s44
    %s47 = sphi 0, %s46
    %s61 = sphi 0, %s47
    %s65 = sphi 0, %s65
    %s67 = sphi 0, %s65
    %s68 = sphi 0, %s67
    %s82 = sphi 0, %s68
    %s86 = sphi 0, %s86
    %s88 = sphi 0, %s86
    %s89 = sphi 0, %s88
    %s103 = sphi 0, %s89
    %s109 = sphi 0, %s111
    %s112 = sphi 0, %s109
    %s113 = sphi 0, %s112
    %s129 = sphi 0, %s113
  $region4: #{_lambda_.1} parent=0 // loop_header_branch
    %13 = sbr.rel (%p11) target = $region8
  $region5: #{_lambda_.1} parent=0 // loop_body
    %s15 = ssub.s32 %s10, 1
    %s16 = ssub.s32 %s10, 2
    %s17 = sadd.s32 %s10, 1
    %s18 = ssub.s32 %s10, %s17
    %p19 = scmp.eq.s32.totalorder %s18, 0
    %s21 = sadd.s32 %s20, 1
    %s22 = scalar_select %p19, %s20, %s21
    %p25 = pneg %p19
    %p26 = scmp.eq.s32.totalorder %s10, 1
    %p27 = por %p25, %p26
    %p28 = scmp.ne.s32.totalorder %s20, %s23
    %p29 = scmp.eq.s32.totalorder %s10, 0
    %p30 = por %p28, %p29
    %p31 = scmp.ne.s32.totalorder %s20, %s23
    %p32 = scmp.eq.s32.totalorder %s15, 1
    %p33 = por %p31, %p32
    %p34 = scmp.ne.s32.totalorder %s23, %s24
    %p35 = scmp.eq.s32.totalorder %s15, 0
    %p36 = por %p34, %p35
    %p37 = scmp.ne.s32.totalorder %s23, %s24
    %p38 = scmp.eq.s32.totalorder %s16, 1
    %p39 = por %p37, %p38
    %p41 = scmp.ne.s32.totalorder %s24, %s40
    %p42 = scmp.eq.s32.totalorder %s16, 0
    %p43 = por %p41, %p42
    %s45 = sadd.s32 %s44, 1
    %p48 = scmp.eq.s32.totalorder %s10, 1
    %p49 = scmp.ne.s32.totalorder %s44, %s46
    %p50 = scmp.eq.s32.totalorder %s10, 0
    %p51 = por %p49, %p50
    %p52 = scmp.ne.s32.totalorder %s44, %s46
    %p53 = scmp.eq.s32.totalorder %s15, 1
    %p54 = por %p52, %p53
    %p55 = scmp.ne.s32.totalorder %s46, %s47
    %p56 = scmp.eq.s32.totalorder %s15, 0
    %p57 = por %p55, %p56
    %p58 = scmp.ne.s32.totalorder %s46, %s47
    %p59 = scmp.eq.s32.totalorder %s16, 1
    %p60 = por %p58, %p59
    %p62 = scmp.ne.s32.totalorder %s47, %s61
    %p63 = scmp.eq.s32.totalorder %s16, 0
    %p64 = por %p62, %p63
    %s66 = sadd.s32 %s65, 1
    %p69 = scmp.eq.s32.totalorder %s10, 1
    %p70 = scmp.ne.s32.totalorder %s65, %s67
    %p71 = scmp.eq.s32.totalorder %s10, 0
    %p72 = por %p70, %p71
    %p73 = scmp.ne.s32.totalorder %s65, %s67
    %p74 = scmp.eq.s32.totalorder %s15, 1
    %p75 = por %p73, %p74
    %p76 = scmp.ne.s32.totalorder %s67, %s68
    %p77 = scmp.eq.s32.totalorder %s15, 0
    %p78 = por %p76, %p77
    %p79 = scmp.ne.s32.totalorder %s67, %s68
    %p80 = scmp.eq.s32.totalorder %s16, 1
    %p81 = por %p79, %p80
    %p83 = scmp.ne.s32.totalorder %s68, %s82
    %p84 = scmp.eq.s32.totalorder %s16, 0
    %p85 = por %p83, %p84
    %s87 = sadd.s32 %s86, 1
    %p90 = scmp.eq.s32.totalorder %s10, 1
    %p91 = scmp.ne.s32.totalorder %s86, %s88
    %p92 = scmp.eq.s32.totalorder %s10, 0
    %p93 = por %p91, %p92
    %p94 = scmp.ne.s32.totalorder %s86, %s88
    %p95 = scmp.eq.s32.totalorder %s15, 1
    %p96 = por %p94, %p95
    %p97 = scmp.ne.s32.totalorder %s88, %s89
    %p98 = scmp.eq.s32.totalorder %s15, 0
    %p99 = por %p97, %p98
    %p100 = scmp.ne.s32.totalorder %s88, %s89
    %p101 = scmp.eq.s32.totalorder %s16, 1
    %p102 = por %p100, %p101
    %p104 = scmp.ne.s32.totalorder %s89, %s103
    %p105 = scmp.eq.s32.totalorder %s16, 0
    %p106 = por %p104, %p105
    %s107 = ssub.s32 %s10, %s17
    %p108 = scmp.eq.s32.totalorder %s107, 0
    %s110 = sadd.s32 %s109, 1
    %s111 = scalar_select %p108, %s109, %s110
    %p114 = pneg %p108
    %p115 = scmp.eq.s32.totalorder %s10, 1
    %p116 = por %p114, %p115
    %p117 = scmp.ne.s32.totalorder %s109, %s112
    %p118 = scmp.eq.s32.totalorder %s10, 0
    %p119 = por %p117, %p118
    %p120 = scmp.ne.s32.totalorder %s109, %s112
    %p121 = scmp.eq.s32.totalorder %s15, 1
    %p122 = por %p120, %p121
    %p123 = scmp.ne.s32.totalorder %s112, %s113
    %p124 = scmp.eq.s32.totalorder %s15, 0
    %p125 = por %p123, %p124
    %p126 = scmp.ne.s32.totalorder %s112, %s113
    %p127 = scmp.eq.s32.totalorder %s16, 1
    %p128 = por %p126, %p127
    %p130 = scmp.ne.s32.totalorder %s113, %s129
    %p131 = scmp.eq.s32.totalorder %s16, 0
    %p132 = por %p130, %p131
    %p133 = scmp.le.s32.totalorder 1, %s10
    %p134 = scmp.lt.s32.totalorder %s10, 3
    %p135 = pnand %p133, %p134
    %p136 = pneg %p135
    // Predicated region
    $region9: #{_lambda_.1} parent=5 // pred_check
      _
    $region10: #{_lambda_.1} parent=5 // pred_check_branch
      %138 = sbr.rel (%p135) target = $region12
    $region11: #{_lambda_.1} parent=5 // pred_region
      %s139 = ssub.s32 %s10, 1
      // Predicated region
      $region13: #{_lambda_.1} parent=11 // pred_check
        %p140 = pneg %p57
      $region14: #{_lambda_.1} parent=11 // pred_check_branch
        %142 = sbr.rel (%p140) target = $region16
      $region15: #{_lambda_.1} parent=11 // pred_region
        _
      $region16: #{_lambda_.1} parent=11 // pred_fallthru
        _
      // Predicated region
      $region17: #{_lambda_.1} parent=11 // pred_check
        %p143 = pneg %p78
      $region18: #{_lambda_.1} parent=11 // pred_check_branch
        %145 = sbr.rel (%p143) target = $region20
      $region19: #{_lambda_.1} parent=11 // pred_region
        _
      $region20: #{_lambda_.1} parent=11 // pred_fallthru
        _
      // Predicated region
      $region21: #{_lambda_.1} parent=11 // pred_check
        %p146 = pneg %p99
      $region22: #{_lambda_.1} parent=11 // pred_check_branch
        %148 = sbr.rel (%p146) target = $region24
      $region23: #{_lambda_.1} parent=11 // pred_region
        _
      $region24: #{_lambda_.1} parent=11 // pred_fallthru
        _
    $region12: #{_lambda_.1} parent=5 // pred_fallthru
      _
    %p149 = scmp.lt.s32.totalorder %s10, 2
    // Predicated region
    $region25: #{_lambda_.1} parent=5 // pred_check
      %p150 = pneg %p149
    $region26: #{_lambda_.1} parent=5 // pred_check_branch
      %152 = sbr.rel (%p150) target = $region28
    $region27: #{_lambda_.1} parent=5 // pred_region
      // Predicated region
      $region29: #{_lambda_.1} parent=27 // pred_check
        %p153 = pneg %p30
      $region30: #{_lambda_.1} parent=27 // pred_check_branch
        %155 = sbr.rel (%p153) target = $region32
      $region31: #{_lambda_.1} parent=27 // pred_region
        %p156 = scmp.lt.s32.totalorder %s10, 1
        %s157 = scalar_select %p156, %s10, 1
        %s158 = smul.addr %s157, 2
        %s159 = smul.addr %s158, 4
        %s160 = scalar_lea.vmem %s0, %s159
      $region32: #{_lambda_.1} parent=27 // pred_fallthru
        _
    $region28: #{_lambda_.1} parent=5 // pred_fallthru
      _
    %p161 = scmp.le.s32.totalorder 1, %s10
    %p162 = scmp.lt.s32.totalorder %s10, 3
    %p163 = pnand %p161, %p162
    %p164 = pneg %p163
    // Predicated region
    $region33: #{_lambda_.1} parent=5 // pred_check
      _
    $region34: #{_lambda_.1} parent=5 // pred_check_branch
      %166 = sbr.rel (%p163) target = $region36
    $region35: #{_lambda_.1} parent=5 // pred_region
      %s167 = ssub.s32 %s10, 1
      %p168 = scmp.lt.s32.totalorder %s15, 1
      %s169 = scalar_select %p168, %s15, 1
      %s170 = smul.addr %s169, 2
      %s171 = smul.addr %s170, 4
      %s172 = scalar_lea.vmem %s0, %s171
      %p173 = pneg %p36
      %p174 = pneg %p33
      %p175 = pneg %p57
      %p176 = pneg %p54
      %p177 = pneg %p78
      %p178 = pneg %p75
      %p179 = pneg %p99
      %p180 = pneg %p96
      %p181 = pneg %p125
      %p182 = pneg %p122
      %p183 = scmp.lt.s32.totalorder %s15, 1
      %s184 = scalar_select %p183, %s15, 1
      %s185 = smul.addr %s184, 2
      %s186 = smul.addr %s185, 4
      %s187 = scalar_lea.vmem %s4, %s186
      %p188 = scmp.lt.s32.totalorder %s15, 1
      %s189 = scalar_select %p188, %s15, 1
      %s190 = smul.addr %s189, 2
      %s191 = smul.addr %s190, 4
      %s192 = scalar_lea.vmem %s0, %s191
      %p193 = scmp.lt.s32.totalorder %s15, 1
      %s194 = scalar_select %p193, %s15, 1
      %s195 = smul.addr %s194, 2
      %s196 = smul.addr %s195, 4
      %s197 = scalar_lea.vmem %s4, %s196
      %v198 = vld [vmem:[%s1] sm:$0x3]
      %v199 = vld [vmem:[%s2] sm:$0x3]
      %v200 = vld [vmem:[%s3] sm:$0x3]
      %vm201 = vcmp.ge.s32.totalorder %v199, 3
      %vm202 = vcmp.lt.s32.totalorder %v199, 19
      %vm203 = vmand %vm201, %vm202
      %vm204 = vcmp.ge.s32.totalorder %v199, 2
      %vm205 = vcmp.lt.s32.totalorder %v199, 18
      %vm206 = vmand %vm204, %vm205
      %vm207 = vcmp.ge.s32.totalorder %v199, 1
      %vm208 = vcmp.lt.s32.totalorder %v199, 17
      %vm209 = vmand %vm207, %vm208
      %vm210 = vcmp.ge.s32.totalorder %v199, 0
      %vm211 = vcmp.lt.s32.totalorder %v199, 16
      %vm212 = vmand %vm210, %vm211
      %vm213 = vcmp.ge.s32.totalorder %v199, 4294967295
      %vm214 = vcmp.lt.s32.totalorder %v199, 15
      %vm215 = vmand %vm213, %vm214
      %vm216 = vcmp.ge.s32.totalorder %v199, 4294967294
      %vm217 = vcmp.lt.s32.totalorder %v199, 14
      %vm218 = vmand %vm216, %vm217
      %vm219 = vcmp.ge.s32.totalorder %v199, 4294967293
      %vm220 = vcmp.lt.s32.totalorder %v199, 13
      %vm221 = vmand %vm219, %vm220
      %vm222 = vcmp.ge.s32.totalorder %v200, 3
      %vm223 = vcmp.lt.s32.totalorder %v200, 19
      %vm224 = vmand %vm222, %vm223
      %vm225 = vcmp.ge.s32.totalorder %v200, 2
      %vm226 = vcmp.lt.s32.totalorder %v200, 18
      %vm227 = vmand %vm225, %vm226
      %vm228 = vcmp.ge.s32.totalorder %v200, 1
      %vm229 = vcmp.lt.s32.totalorder %v200, 17
      %vm230 = vmand %vm228, %vm229
      %vm231 = vcmp.ge.s32.totalorder %v200, 0
      %vm232 = vcmp.lt.s32.totalorder %v200, 16
      %vm233 = vmand %vm231, %vm232
      %vm234 = vcmp.ge.s32.totalorder %v200, 4294967295
      %vm235 = vcmp.lt.s32.totalorder %v200, 15
      %vm236 = vmand %vm234, %vm235
      %vm237 = vcmp.ge.s32.totalorder %v200, 4294967294
      %vm238 = vcmp.lt.s32.totalorder %v200, 14
      %vm239 = vmand %vm237, %vm238
      %vm240 = vcmp.ge.s32.totalorder %v200, 4294967293
      %vm241 = vcmp.lt.s32.totalorder %v200, 13
      %vm242 = vmand %vm240, %vm241
      %v243 = vld [vmem:[%s192] sm:$0xff]
      %v245 = vcombine.high %v243, %v243
      %vm247 = vcmask 1043456
      %v248 = vsel %vm247, %v243, -inf
      %v249 = vrot.slane %v248, 4
      %v250 = vmax.f32 %v248, %v249
      %v251 = vrot.slane %v250, 2
      %v252 = vmax.f32 %v250, %v251
      %v253 = vrot.slane %v252, 1
      %v254 = vmax.f32 %v252, %v253
      %v255 = vsel %vm247, %v245, -inf
      %v256 = vrot.slane %v255, 4
      %v257 = vmax.f32 %v255, %v256
      %v258 = vrot.slane %v257, 2
      %v259 = vmax.f32 %v257, %v258
      %v260 = vrot.slane %v259, 1
      %v261 = vmax.f32 %v259, %v260
      %v262 = vsel %vm247, %v243, 0.0
      %v263 = vrot.slane %v262, 4
      %v264 = vadd.f32 %v262, %v263
      %v265 = vrot.slane %v264, 2
      %v266 = vadd.f32 %v264, %v265
      %v267 = vrot.slane %v266, 1
      %v268 = vadd.f32 %v266, %v267
      %v269 = vsel %vm247, %v245, 0.0
      %v270 = vrot.slane %v269, 4
      %v271 = vadd.f32 %v269, %v270
      %v272 = vrot.slane %v271, 2
      %v273 = vadd.f32 %v271, %v272
      %v274 = vrot.slane %v273, 1
      %v275 = vadd.f32 %v273, %v274
      %vm276 = vcmask 1040384
      %v277 = vsel %vm276, %v254, %v268
      %v278 = vsel %vm276, %v261, %v275
      %279 = vrot.lane.b32.xlu0 %v277, 51
      %v280 = vpop.permute.xlu0 %279
      %281 = vrot.lane.b32.xlu0 %v278, 51
      %v282 = vpop.permute.xlu0 %281
      %v283 = vlaneseq
      %v284 = vand.u32 %v283, 127
      %vm285 = vcmp.lt.s32.totalorder %v284, 51
      %v286 = vsel %vm285, %v280, %v282
      %v287 = vsel %vm285, %v282, %v280
      %vm288 = vmand %vm203, %vm224
      %v289 = vsel %vm288, 1, 0
      %v290 = vlaneseq
      %v291 = vshrl.u32 %v290, 7
      %v292 = vsub.s32 0, %v291
      %v293 = vrot.slane %v289, %v292
      %v294 = vlaneseq
      %v295 = vshrl.u32 %v294, 7
      %v296 = vsub.s32 1, %v295
      %v297 = vrot.slane %v289, %v296
      %vm298 = vcmp.eq.s32.totalorder %v293, 1
      %vm299 = vcmp.eq.s32.totalorder %v297, 1
      %v300 = vsel %vm298, %v287, 0.0
      %v301 = vsel %vm299, %v286, 0.0
      %303 = vset.pattern.permute.xlu0 0
      %304 = vperm.xlu0 %303, %v198
      %v305 = vpop.permute.xlu0 %304
      %v307 = vmul.f32 %v305, %v300
      %v308 = vmul.f32 %v305, %v301
      %v309 = vadd.f32 %v307, 0.0
      %v310 = vadd.f32 %v308, 0.0
      %311 = vrot.lane.b32.xlu0 %v277, 50
      %v312 = vpop.permute.xlu0 %311
      %313 = vrot.lane.b32.xlu0 %v278, 50
      %v314 = vpop.permute.xlu0 %313
      %vm315 = vcmp.lt.s32.totalorder %v284, 50
      %v316 = vsel %vm315, %v312, %v314
      %v317 = vsel %vm315, %v314, %v312
      %vm318 = vmand %vm203, %vm227
      %v319 = vsel %vm318, 1, 0
      %v320 = vlaneseq
      %v321 = vshrl.u32 %v320, 7
      %v322 = vsub.s32 0, %v321
      %v323 = vrot.slane %v319, %v322
      %v324 = vlaneseq
      %v325 = vshrl.u32 %v324, 7
      %v326 = vsub.s32 1, %v325
      %v327 = vrot.slane %v319, %v326
      %vm328 = vcmp.eq.s32.totalorder %v323, 1
      %vm329 = vcmp.eq.s32.totalorder %v327, 1
      %v330 = vsel %vm328, %v317, 0.0
      %v331 = vsel %vm329, %v316, 0.0
      %332 = vset.pattern.permute.xlu0 1
      %333 = vperm.xlu0 %332, %v198
      %v334 = vpop.permute.xlu0 %333
      %v336 = vmul.f32 %v334, %v330
      %v337 = vmul.f32 %v334, %v331
      %v338 = vadd.f32 %v336, 0.0
      %v339 = vadd.f32 %v337, 0.0
      %340 = vrot.lane.b32.xlu0 %v277, 49
      %v341 = vpop.permute.xlu0 %340
      %342 = vrot.lane.b32.xlu0 %v278, 49
      %v343 = vpop.permute.xlu0 %342
      %vm344 = vcmp.lt.s32.totalorder %v284, 49
      %v345 = vsel %vm344, %v341, %v343
      %v346 = vsel %vm344, %v343, %v341
      %vm347 = vmand %vm203, %vm230
      %v348 = vsel %vm347, 1, 0
      %v349 = vlaneseq
      %v350 = vshrl.u32 %v349, 7
      %v351 = vsub.s32 0, %v350
      %v352 = vrot.slane %v348, %v351
      %v353 = vlaneseq
      %v354 = vshrl.u32 %v353, 7
      %v355 = vsub.s32 1, %v354
      %v356 = vrot.slane %v348, %v355
      %vm357 = vcmp.eq.s32.totalorder %v352, 1
      %vm358 = vcmp.eq.s32.totalorder %v356, 1
      %v359 = vsel %vm357, %v346, 0.0
      %v360 = vsel %vm358, %v345, 0.0
      %361 = vset.pattern.permute.xlu0 2
      %362 = vperm.xlu0 %361, %v198
      %v363 = vpop.permute.xlu0 %362
      %v365 = vmul.f32 %v363, %v359
      %v366 = vmul.f32 %v363, %v360
      %v367 = vadd.f32 %v309, %v365
      %v368 = vadd.f32 %v310, %v366
      %369 = vrot.lane.b32.xlu0 %v277, 48
      %v370 = vpop.permute.xlu0 %369
      %371 = vrot.lane.b32.xlu0 %v278, 48
      %v372 = vpop.permute.xlu0 %371
      %vm373 = vcmp.lt.s32.totalorder %v284, 48
      %v374 = vsel %vm373, %v370, %v372
      %v375 = vsel %vm373, %v372, %v370
      %vm376 = vmand %vm203, %vm233
      %v377 = vsel %vm376, 1, 0
      %v378 = vlaneseq
      %v379 = vshrl.u32 %v378, 7
      %v380 = vsub.s32 0, %v379
      %v381 = vrot.slane %v377, %v380
      %v382 = vlaneseq
      %v383 = vshrl.u32 %v382, 7
      %v384 = vsub.s32 1, %v383
      %v385 = vrot.slane %v377, %v384
      %vm386 = vcmp.eq.s32.totalorder %v381, 1
      %vm387 = vcmp.eq.s32.totalorder %v385, 1
      %v388 = vsel %vm386, %v375, 0.0
      %v389 = vsel %vm387, %v374, 0.0
      %390 = vset.pattern.permute.xlu0 3
      %391 = vperm.xlu0 %390, %v198
      %v392 = vpop.permute.xlu0 %391
      %v394 = vmul.f32 %v392, %v388
      %v395 = vmul.f32 %v392, %v389
      %v396 = vadd.f32 %v338, %v394
      %v397 = vadd.f32 %v339, %v395
      %398 = vrot.lane.b32.xlu0 %v277, 47
      %v399 = vpop.permute.xlu0 %398
      %400 = vrot.lane.b32.xlu0 %v278, 47
      %v401 = vpop.permute.xlu0 %400
      %vm402 = vcmp.lt.s32.totalorder %v284, 47
      %v403 = vsel %vm402, %v399, %v401
      %v404 = vsel %vm402, %v401, %v399
      %vm405 = vmand %vm203, %vm236
      %v406 = vsel %vm405, 1, 0
      %v407 = vlaneseq
      %v408 = vshrl.u32 %v407, 7
      %v409 = vsub.s32 0, %v408
      %v410 = vrot.slane %v406, %v409
      %v411 = vlaneseq
      %v412 = vshrl.u32 %v411, 7
      %v413 = vsub.s32 1, %v412
      %v414 = vrot.slane %v406, %v413
      %vm415 = vcmp.eq.s32.totalorder %v410, 1
      %vm416 = vcmp.eq.s32.totalorder %v414, 1
      %v417 = vsel %vm415, %v404, 0.0
      %v418 = vsel %vm416, %v403, 0.0
      %419 = vset.pattern.permute.xlu0 4
      %420 = vperm.xlu0 %419, %v198
      %v421 = vpop.permute.xlu0 %420
      %v423 = vmul.f32 %v421, %v417
      %v424 = vmul.f32 %v421, %v418
      %v425 = vadd.f32 %v367, %v423
      %v426 = vadd.f32 %v368, %v424
      %427 = vrot.lane.b32.xlu0 %v277, 46
      %v428 = vpop.permute.xlu0 %427
      %429 = vrot.lane.b32.xlu0 %v278, 46
      %v430 = vpop.permute.xlu0 %429
      %vm431 = vcmp.lt.s32.totalorder %v284, 46
      %v432 = vsel %vm431, %v428, %v430
      %v433 = vsel %vm431, %v430, %v428
      %vm434 = vmand %vm203, %vm239
      %v435 = vsel %vm434, 1, 0
      %v436 = vlaneseq
      %v437 = vshrl.u32 %v436, 7
      %v438 = vsub.s32 0, %v437
      %v439 = vrot.slane %v435, %v438
      %v440 = vlaneseq
      %v441 = vshrl.u32 %v440, 7
      %v442 = vsub.s32 1, %v441
      %v443 = vrot.slane %v435, %v442
      %vm444 = vcmp.eq.s32.totalorder %v439, 1
      %vm445 = vcmp.eq.s32.totalorder %v443, 1
      %v446 = vsel %vm444, %v433, 0.0
      %v447 = vsel %vm445, %v432, 0.0
      %448 = vset.pattern.permute.xlu0 5
      %449 = vperm.xlu0 %448, %v198
      %v450 = vpop.permute.xlu0 %449
      %v452 = vmul.f32 %v450, %v446
      %v453 = vmul.f32 %v450, %v447
      %v454 = vadd.f32 %v396, %v452
      %v455 = vadd.f32 %v397, %v453
      %456 = vrot.lane.b32.xlu0 %v277, 45
      %v457 = vpop.permute.xlu0 %456
      %458 = vrot.lane.b32.xlu0 %v278, 45
      %v459 = vpop.permute.xlu0 %458
      %vm460 = vcmp.lt.s32.totalorder %v284, 45
      %v461 = vsel %vm460, %v457, %v459
      %v462 = vsel %vm460, %v459, %v457
      %vm463 = vmand %vm203, %vm242
      %v464 = vsel %vm463, 1, 0
      %v465 = vlaneseq
      %v466 = vshrl.u32 %v465, 7
      %v467 = vsub.s32 0, %v466
      %v468 = vrot.slane %v464, %v467
      %v469 = vlaneseq
      %v470 = vshrl.u32 %v469, 7
      %v471 = vsub.s32 1, %v470
      %v472 = vrot.slane %v464, %v471
      %vm473 = vcmp.eq.s32.totalorder %v468, 1
      %vm474 = vcmp.eq.s32.totalorder %v472, 1
      %v475 = vsel %vm473, %v462, 0.0
      %v476 = vsel %vm474, %v461, 0.0
      %477 = vset.pattern.permute.xlu0 6
      %478 = vperm.xlu0 %477, %v198
      %v479 = vpop.permute.xlu0 %478
      %v481 = vmul.f32 %v479, %v475
      %v482 = vmul.f32 %v479, %v476
      %v483 = vadd.f32 %v425, %v481
      %v484 = vadd.f32 %v426, %v482
      %485 = vrot.lane.b32.xlu0 %v277, 35
      %v486 = vpop.permute.xlu0 %485
      %487 = vrot.lane.b32.xlu0 %v278, 35
      %v488 = vpop.permute.xlu0 %487
      %vm489 = vcmp.lt.s32.totalorder %v284, 35
      %v490 = vsel %vm489, %v486, %v488
      %v491 = vsel %vm489, %v488, %v486
      %vm492 = vmand %vm206, %vm224
      %v493 = vsel %vm492, 1, 0
      %v494 = vlaneseq
      %v495 = vshrl.u32 %v494, 7
      %v496 = vsub.s32 0, %v495
      %v497 = vrot.slane %v493, %v496
      %v498 = vlaneseq
      %v499 = vshrl.u32 %v498, 7
      %v500 = vsub.s32 1, %v499
      %v501 = vrot.slane %v493, %v500
      %vm502 = vcmp.eq.s32.totalorder %v497, 1
      %vm503 = vcmp.eq.s32.totalorder %v501, 1
      %v504 = vsel %vm502, %v491, 0.0
      %v505 = vsel %vm503, %v490, 0.0
      %506 = vset.pattern.permute.xlu0 7
      %507 = vperm.xlu0 %506, %v198
      %v508 = vpop.permute.xlu0 %507
      %v510 = vmul.f32 %v508, %v504
      %v511 = vmul.f32 %v508, %v505
      %v512 = vadd.f32 %v454, %v510
      %v513 = vadd.f32 %v455, %v511
      %514 = vrot.lane.b32.xlu0 %v277, 34
      %v515 = vpop.permute.xlu0 %514
      %516 = vrot.lane.b32.xlu0 %v278, 34
      %v517 = vpop.permute.xlu0 %516
      %vm518 = vcmp.lt.s32.totalorder %v284, 34
      %v519 = vsel %vm518, %v515, %v517
      %v520 = vsel %vm518, %v517, %v515
      %vm521 = vmand %vm206, %vm227
      %v522 = vsel %vm521, 1, 0
      %v523 = vlaneseq
      %v524 = vshrl.u32 %v523, 7
      %v525 = vsub.s32 0, %v524
      %v526 = vrot.slane %v522, %v525
      %v527 = vlaneseq
      %v528 = vshrl.u32 %v527, 7
      %v529 = vsub.s32 1, %v528
      %v530 = vrot.slane %v522, %v529
      %vm531 = vcmp.eq.s32.totalorder %v526, 1
      %vm532 = vcmp.eq.s32.totalorder %v530, 1
      %v533 = vsel %vm531, %v520, 0.0
      %v534 = vsel %vm532, %v519, 0.0
      %535 = vset.pattern.permute.xlu0 8
      %536 = vperm.xlu0 %535, %v198
      %v537 = vpop.permute.xlu0 %536
      %v539 = vmul.f32 %v537, %v533
      %v540 = vmul.f32 %v537, %v534
      %v541 = vadd.f32 %v483, %v539
      %v542 = vadd.f32 %v484, %v540
      %543 = vrot.lane.b32.xlu0 %v277, 33
      %v544 = vpop.permute.xlu0 %543
      %545 = vrot.lane.b32.xlu0 %v278, 33
      %v546 = vpop.permute.xlu0 %545
      %vm547 = vcmp.lt.s32.totalorder %v284, 33
      %v548 = vsel %vm547, %v544, %v546
      %v549 = vsel %vm547, %v546, %v544
      %vm550 = vmand %vm206, %vm230
      %v551 = vsel %vm550, 1, 0
      %v552 = vlaneseq
      %v553 = vshrl.u32 %v552, 7
      %v554 = vsub.s32 0, %v553
      %v555 = vrot.slane %v551, %v554
      %v556 = vlaneseq
      %v557 = vshrl.u32 %v556, 7
      %v558 = vsub.s32 1, %v557
      %v559 = vrot.slane %v551, %v558
      %vm560 = vcmp.eq.s32.totalorder %v555, 1
      %vm561 = vcmp.eq.s32.totalorder %v559, 1
      %v562 = vsel %vm560, %v549, 0.0
      %v563 = vsel %vm561, %v548, 0.0
      %564 = vset.pattern.permute.xlu0 9
      %565 = vperm.xlu0 %564, %v198
      %v566 = vpop.permute.xlu0 %565
      %v568 = vmul.f32 %v566, %v562
      %v569 = vmul.f32 %v566, %v563
      %v570 = vadd.f32 %v512, %v568
      %v571 = vadd.f32 %v513, %v569
      %572 = vrot.lane.b32.xlu0 %v277, 32
      %v573 = vpop.permute.xlu0 %572
      %574 = vrot.lane.b32.xlu0 %v278, 32
      %v575 = vpop.permute.xlu0 %574
      %vm576 = vcmp.lt.s32.totalorder %v284, 32
      %v577 = vsel %vm576, %v573, %v575
      %v578 = vsel %vm576, %v575, %v573
      %vm579 = vmand %vm206, %vm233
      %v580 = vsel %vm579, 1, 0
      %v581 = vlaneseq
      %v582 = vshrl.u32 %v581, 7
      %v583 = vsub.s32 0, %v582
      %v584 = vrot.slane %v580, %v583
      %v585 = vlaneseq
      %v586 = vshrl.u32 %v585, 7
      %v587 = vsub.s32 1, %v586
      %v588 = vrot.slane %v580, %v587
      %vm589 = vcmp.eq.s32.totalorder %v584, 1
      %vm590 = vcmp.eq.s32.totalorder %v588, 1
      %v591 = vsel %vm589, %v578, 0.0
      %v592 = vsel %vm590, %v577, 0.0
      %593 = vset.pattern.permute.xlu0 10
      %594 = vperm.xlu0 %593, %v198
      %v595 = vpop.permute.xlu0 %594
      %v597 = vmul.f32 %v595, %v591
      %v598 = vmul.f32 %v595, %v592
      %v599 = vadd.f32 %v541, %v597
      %v600 = vadd.f32 %v542, %v598
      %601 = vrot.lane.b32.xlu0 %v277, 31
      %v602 = vpop.permute.xlu0 %601
      %603 = vrot.lane.b32.xlu0 %v278, 31
      %v604 = vpop.permute.xlu0 %603
      %vm605 = vcmp.lt.s32.totalorder %v284, 31
      %v606 = vsel %vm605, %v602, %v604
      %v607 = vsel %vm605, %v604, %v602
      %vm608 = vmand %vm206, %vm236
      %v609 = vsel %vm608, 1, 0
      %v610 = vlaneseq
      %v611 = vshrl.u32 %v610, 7
      %v612 = vsub.s32 0, %v611
      %v613 = vrot.slane %v609, %v612
      %v614 = vlaneseq
      %v615 = vshrl.u32 %v614, 7
      %v616 = vsub.s32 1, %v615
      %v617 = vrot.slane %v609, %v616
      %vm618 = vcmp.eq.s32.totalorder %v613, 1
      %vm619 = vcmp.eq.s32.totalorder %v617, 1
      %v620 = vsel %vm618, %v607, 0.0
      %v621 = vsel %vm619, %v606, 0.0
      %622 = vset.pattern.permute.xlu0 11
      %623 = vperm.xlu0 %622, %v198
      %v624 = vpop.permute.xlu0 %623
      %v626 = vmul.f32 %v624, %v620
      %v627 = vmul.f32 %v624, %v621
      %v628 = vadd.f32 %v570, %v626
      %v629 = vadd.f32 %v571, %v627
      %630 = vrot.lane.b32.xlu0 %v277, 30
      %v631 = vpop.permute.xlu0 %630
      %632 = vrot.lane.b32.xlu0 %v278, 30
      %v633 = vpop.permute.xlu0 %632
      %vm634 = vcmp.lt.s32.totalorder %v284, 30
      %v635 = vsel %vm634, %v631, %v633
      %v636 = vsel %vm634, %v633, %v631
      %vm637 = vmand %vm206, %vm239
      %v638 = vsel %vm637, 1, 0
      %v639 = vlaneseq
      %v640 = vshrl.u32 %v639, 7
      %v641 = vsub.s32 0, %v640
      %v642 = vrot.slane %v638, %v641
      %v643 = vlaneseq
      %v644 = vshrl.u32 %v643, 7
      %v645 = vsub.s32 1, %v644
      %v646 = vrot.slane %v638, %v645
      %vm647 = vcmp.eq.s32.totalorder %v642, 1
      %vm648 = vcmp.eq.s32.totalorder %v646, 1
      %v649 = vsel %vm647, %v636, 0.0
      %v650 = vsel %vm648, %v635, 0.0
      %651 = vset.pattern.permute.xlu0 12
      %652 = vperm.xlu0 %651, %v198
      %v653 = vpop.permute.xlu0 %652
      %v655 = vmul.f32 %v653, %v649
      %v656 = vmul.f32 %v653, %v650
      %v657 = vadd.f32 %v599, %v655
      %v658 = vadd.f32 %v600, %v656
      %659 = vrot.lane.b32.xlu0 %v277, 29
      %v660 = vpop.permute.xlu0 %659
      %661 = vrot.lane.b32.xlu0 %v278, 29
      %v662 = vpop.permute.xlu0 %661
      %vm663 = vcmp.lt.s32.totalorder %v284, 29
      %v664 = vsel %vm663, %v660, %v662
      %v665 = vsel %vm663, %v662, %v660
      %vm666 = vmand %vm206, %vm242
      %v667 = vsel %vm666, 1, 0
      %v668 = vlaneseq
      %v669 = vshrl.u32 %v668, 7
      %v670 = vsub.s32 0, %v669
      %v671 = vrot.slane %v667, %v670
      %v672 = vlaneseq
      %v673 = vshrl.u32 %v672, 7
      %v674 = vsub.s32 1, %v673
      %v675 = vrot.slane %v667, %v674
      %vm676 = vcmp.eq.s32.totalorder %v671, 1
      %vm677 = vcmp.eq.s32.totalorder %v675, 1
      %v678 = vsel %vm676, %v665, 0.0
      %v679 = vsel %vm677, %v664, 0.0
      %680 = vset.pattern.permute.xlu0 13
      %681 = vperm.xlu0 %680, %v198
      %v682 = vpop.permute.xlu0 %681
      %v684 = vmul.f32 %v682, %v678
      %v685 = vmul.f32 %v682, %v679
      %v686 = vadd.f32 %v628, %v684
      %v687 = vadd.f32 %v629, %v685
      %688 = vrot.lane.b32.xlu0 %v277, 19
      %v689 = vpop.permute.xlu0 %688
      %690 = vrot.lane.b32.xlu0 %v278, 19
      %v691 = vpop.permute.xlu0 %690
      %vm692 = vcmp.lt.s32.totalorder %v284, 19
      %v693 = vsel %vm692, %v689, %v691
      %v694 = vsel %vm692, %v691, %v689
      %vm695 = vmand %vm209, %vm224
      %v696 = vsel %vm695, 1, 0
      %v697 = vlaneseq
      %v698 = vshrl.u32 %v697, 7
      %v699 = vsub.s32 0, %v698
      %v700 = vrot.slane %v696, %v699
      %v701 = vlaneseq
      %v702 = vshrl.u32 %v701, 7
      %v703 = vsub.s32 1, %v702
      %v704 = vrot.slane %v696, %v703
      %vm705 = vcmp.eq.s32.totalorder %v700, 1
      %vm706 = vcmp.eq.s32.totalorder %v704, 1
      %v707 = vsel %vm705, %v694, 0.0
      %v708 = vsel %vm706, %v693, 0.0
      %709 = vset.pattern.permute.xlu0 14
      %710 = vperm.xlu0 %709, %v198
      %v711 = vpop.permute.xlu0 %710
      %v713 = vmul.f32 %v711, %v707
      %v714 = vmul.f32 %v711, %v708
      %v715 = vadd.f32 %v657, %v713
      %v716 = vadd.f32 %v658, %v714
      %717 = vrot.lane.b32.xlu0 %v277, 18
      %v718 = vpop.permute.xlu0 %717
      %719 = vrot.lane.b32.xlu0 %v278, 18
      %v720 = vpop.permute.xlu0 %719
      %vm721 = vcmp.lt.s32.totalorder %v284, 18
      %v722 = vsel %vm721, %v718, %v720
      %v723 = vsel %vm721, %v720, %v718
      %vm724 = vmand %vm209, %vm227
      %v725 = vsel %vm724, 1, 0
      %v726 = vlaneseq
      %v727 = vshrl.u32 %v726, 7
      %v728 = vsub.s32 0, %v727
      %v729 = vrot.slane %v725, %v728
      %v730 = vlaneseq
      %v731 = vshrl.u32 %v730, 7
      %v732 = vsub.s32 1, %v731
      %v733 = vrot.slane %v725, %v732
      %vm734 = vcmp.eq.s32.totalorder %v729, 1
      %vm735 = vcmp.eq.s32.totalorder %v733, 1
      %v736 = vsel %vm734, %v723, 0.0
      %v737 = vsel %vm735, %v722, 0.0
      %738 = vset.pattern.permute.xlu0 15
      %739 = vperm.xlu0 %738, %v198
      %v740 = vpop.permute.xlu0 %739
      %v742 = vmul.f32 %v740, %v736
      %v743 = vmul.f32 %v740, %v737
      %v744 = vadd.f32 %v686, %v742
      %v745 = vadd.f32 %v687, %v743
      %746 = vrot.lane.b32.xlu0 %v277, 17
      %v747 = vpop.permute.xlu0 %746
      %748 = vrot.lane.b32.xlu0 %v278, 17
      %v749 = vpop.permute.xlu0 %748
      %vm750 = vcmp.lt.s32.totalorder %v284, 17
      %v751 = vsel %vm750, %v747, %v749
      %v752 = vsel %vm750, %v749, %v747
      %vm753 = vmand %vm209, %vm230
      %v754 = vsel %vm753, 1, 0
      %v755 = vlaneseq
      %v756 = vshrl.u32 %v755, 7
      %v757 = vsub.s32 0, %v756
      %v758 = vrot.slane %v754, %v757
      %v759 = vlaneseq
      %v760 = vshrl.u32 %v759, 7
      %v761 = vsub.s32 1, %v760
      %v762 = vrot.slane %v754, %v761
      %vm763 = vcmp.eq.s32.totalorder %v758, 1
      %vm764 = vcmp.eq.s32.totalorder %v762, 1
      %v765 = vsel %vm763, %v752, 0.0
      %v766 = vsel %vm764, %v751, 0.0
      %767 = vset.pattern.permute.xlu0 16
      %768 = vperm.xlu0 %767, %v198
      %v769 = vpop.permute.xlu0 %768
      %v771 = vmul.f32 %v769, %v765
      %v772 = vmul.f32 %v769, %v766
      %v773 = vadd.f32 %v715, %v771
      %v774 = vadd.f32 %v716, %v772
      %775 = vrot.lane.b32.xlu0 %v277, 16
      %v776 = vpop.permute.xlu0 %775
      %777 = vrot.lane.b32.xlu0 %v278, 16
      %v778 = vpop.permute.xlu0 %777
      %vm779 = vcmp.lt.s32.totalorder %v284, 16
      %v780 = vsel %vm779, %v776, %v778
      %v781 = vsel %vm779, %v778, %v776
      %vm782 = vmand %vm209, %vm233
      %v783 = vsel %vm782, 1, 0
      %v784 = vlaneseq
      %v785 = vshrl.u32 %v784, 7
      %v786 = vsub.s32 0, %v785
      %v787 = vrot.slane %v783, %v786
      %v788 = vlaneseq
      %v789 = vshrl.u32 %v788, 7
      %v790 = vsub.s32 1, %v789
      %v791 = vrot.slane %v783, %v790
      %vm792 = vcmp.eq.s32.totalorder %v787, 1
      %vm793 = vcmp.eq.s32.totalorder %v791, 1
      %v794 = vsel %vm792, %v781, 0.0
      %v795 = vsel %vm793, %v780, 0.0
      %796 = vset.pattern.permute.xlu0 17
      %797 = vperm.xlu0 %796, %v198
      %v798 = vpop.permute.xlu0 %797
      %v800 = vmul.f32 %v798, %v794
      %v801 = vmul.f32 %v798, %v795
      %v802 = vadd.f32 %v744, %v800
      %v803 = vadd.f32 %v745, %v801
      %804 = vrot.lane.b32.xlu0 %v277, 15
      %v805 = vpop.permute.xlu0 %804
      %806 = vrot.lane.b32.xlu0 %v278, 15
      %v807 = vpop.permute.xlu0 %806
      %vm808 = vcmp.lt.s32.totalorder %v284, 15
      %v809 = vsel %vm808, %v805, %v807
      %v810 = vsel %vm808, %v807, %v805
      %vm811 = vmand %vm209, %vm236
      %v812 = vsel %vm811, 1, 0
      %v813 = vlaneseq
      %v814 = vshrl.u32 %v813, 7
      %v815 = vsub.s32 0, %v814
      %v816 = vrot.slane %v812, %v815
      %v817 = vlaneseq
      %v818 = vshrl.u32 %v817, 7
      %v819 = vsub.s32 1, %v818
      %v820 = vrot.slane %v812, %v819
      %vm821 = vcmp.eq.s32.totalorder %v816, 1
      %vm822 = vcmp.eq.s32.totalorder %v820, 1
      %v823 = vsel %vm821, %v810, 0.0
      %v824 = vsel %vm822, %v809, 0.0
      %825 = vset.pattern.permute.xlu0 18
      %826 = vperm.xlu0 %825, %v198
      %v827 = vpop.permute.xlu0 %826
      %v829 = vmul.f32 %v827, %v823
      %v830 = vmul.f32 %v827, %v824
      %v831 = vadd.f32 %v773, %v829
      %v832 = vadd.f32 %v774, %v830
      %833 = vrot.lane.b32.xlu0 %v277, 14
      %v834 = vpop.permute.xlu0 %833
      %835 = vrot.lane.b32.xlu0 %v278, 14
      %v836 = vpop.permute.xlu0 %835
      %vm837 = vcmp.lt.s32.totalorder %v284, 14
      %v838 = vsel %vm837, %v834, %v836
      %v839 = vsel %vm837, %v836, %v834
      %vm840 = vmand %vm209, %vm239
      %v841 = vsel %vm840, 1, 0
      %v842 = vlaneseq
      %v843 = vshrl.u32 %v842, 7
      %v844 = vsub.s32 0, %v843
      %v845 = vrot.slane %v841, %v844
      %v846 = vlaneseq
      %v847 = vshrl.u32 %v846, 7
      %v848 = vsub.s32 1, %v847
      %v849 = vrot.slane %v841, %v848
      %vm850 = vcmp.eq.s32.totalorder %v845, 1
      %vm851 = vcmp.eq.s32.totalorder %v849, 1
      %v852 = vsel %vm850, %v839, 0.0
      %v853 = vsel %vm851, %v838, 0.0
      %854 = vset.pattern.permute.xlu0 19
      %855 = vperm.xlu0 %854, %v198
      %v856 = vpop.permute.xlu0 %855
      %v858 = vmul.f32 %v856, %v852
      %v859 = vmul.f32 %v856, %v853
      %v860 = vadd.f32 %v802, %v858
      %v861 = vadd.f32 %v803, %v859
      %862 = vrot.lane.b32.xlu0 %v277, 13
      %v863 = vpop.permute.xlu0 %862
      %864 = vrot.lane.b32.xlu0 %v278, 13
      %v865 = vpop.permute.xlu0 %864
      %vm866 = vcmp.lt.s32.totalorder %v284, 13
      %v867 = vsel %vm866, %v863, %v865
      %v868 = vsel %vm866, %v865, %v863
      %vm869 = vmand %vm209, %vm242
      %v870 = vsel %vm869, 1, 0
      %v871 = vlaneseq
      %v872 = vshrl.u32 %v871, 7
      %v873 = vsub.s32 0, %v872
      %v874 = vrot.slane %v870, %v873
      %v875 = vlaneseq
      %v876 = vshrl.u32 %v875, 7
      %v877 = vsub.s32 1, %v876
      %v878 = vrot.slane %v870, %v877
      %vm879 = vcmp.eq.s32.totalorder %v874, 1
      %vm880 = vcmp.eq.s32.totalorder %v878, 1
      %v881 = vsel %vm879, %v868, 0.0
      %v882 = vsel %vm880, %v867, 0.0
      %883 = vset.pattern.permute.xlu0 20
      %884 = vperm.xlu0 %883, %v198
      %v885 = vpop.permute.xlu0 %884
      %v887 = vmul.f32 %v885, %v881
      %v888 = vmul.f32 %v885, %v882
      %v889 = vadd.f32 %v831, %v887
      %v890 = vadd.f32 %v832, %v888
      %891 = vrot.lane.b32.xlu0 %v277, 3
      %v892 = vpop.permute.xlu0 %891
      %893 = vrot.lane.b32.xlu0 %v278, 3
      %v894 = vpop.permute.xlu0 %893
      %vm895 = vcmp.lt.s32.totalorder %v284, 3
      %v896 = vsel %vm895, %v892, %v894
      %v897 = vsel %vm895, %v894, %v892
      %vm898 = vmand %vm212, %vm224
      %v899 = vsel %vm898, 1, 0
      %v900 = vlaneseq
      %v901 = vshrl.u32 %v900, 7
      %v902 = vsub.s32 0, %v901
      %v903 = vrot.slane %v899, %v902
      %v904 = vlaneseq
      %v905 = vshrl.u32 %v904, 7
      %v906 = vsub.s32 1, %v905
      %v907 = vrot.slane %v899, %v906
      %vm908 = vcmp.eq.s32.totalorder %v903, 1
      %vm909 = vcmp.eq.s32.totalorder %v907, 1
      %v910 = vsel %vm908, %v897, 0.0
      %v911 = vsel %vm909, %v896, 0.0
      %912 = vset.pattern.permute.xlu0 21
      %913 = vperm.xlu0 %912, %v198
      %v914 = vpop.permute.xlu0 %913
      %v916 = vmul.f32 %v914, %v910
      %v917 = vmul.f32 %v914, %v911
      %v918 = vadd.f32 %v860, %v916
      %v919 = vadd.f32 %v861, %v917
      %920 = vrot.lane.b32.xlu0 %v277, 2
      %v921 = vpop.permute.xlu0 %920
      %922 = vrot.lane.b32.xlu0 %v278, 2
      %v923 = vpop.permute.xlu0 %922
      %vm924 = vcmp.lt.s32.totalorder %v284, 2
      %v925 = vsel %vm924, %v921, %v923
      %v926 = vsel %vm924, %v923, %v921
      %vm927 = vmand %vm212, %vm227
      %v928 = vsel %vm927, 1, 0
      %v929 = vlaneseq
      %v930 = vshrl.u32 %v929, 7
      %v931 = vsub.s32 0, %v930
      %v932 = vrot.slane %v928, %v931
      %v933 = vlaneseq
      %v934 = vshrl.u32 %v933, 7
      %v935 = vsub.s32 1, %v934
      %v936 = vrot.slane %v928, %v935
      %vm937 = vcmp.eq.s32.totalorder %v932, 1
      %vm938 = vcmp.eq.s32.totalorder %v936, 1
      %v939 = vsel %vm937, %v926, 0.0
      %v940 = vsel %vm938, %v925, 0.0
      %941 = vset.pattern.permute.xlu0 22
      %942 = vperm.xlu0 %941, %v198
      %v943 = vpop.permute.xlu0 %942
      %v945 = vmul.f32 %v943, %v939
      %v946 = vmul.f32 %v943, %v940
      %v947 = vadd.f32 %v889, %v945
      %v948 = vadd.f32 %v890, %v946
      %949 = vrot.lane.b32.xlu0 %v277, 1
      %v950 = vpop.permute.xlu0 %949
      %951 = vrot.lane.b32.xlu0 %v278, 1
      %v952 = vpop.permute.xlu0 %951
      %vm953 = vcmp.lt.s32.totalorder %v284, 1
      %v954 = vsel %vm953, %v950, %v952
      %v955 = vsel %vm953, %v952, %v950
      %vm956 = vmand %vm212, %vm230
      %v957 = vsel %vm956, 1, 0
      %v958 = vlaneseq
      %v959 = vshrl.u32 %v958, 7
      %v960 = vsub.s32 0, %v959
      %v961 = vrot.slane %v957, %v960
      %v962 = vlaneseq
      %v963 = vshrl.u32 %v962, 7
      %v964 = vsub.s32 1, %v963
      %v965 = vrot.slane %v957, %v964
      %vm966 = vcmp.eq.s32.totalorder %v961, 1
      %vm967 = vcmp.eq.s32.totalorder %v965, 1
      %v968 = vsel %vm966, %v955, 0.0
      %v969 = vsel %vm967, %v954, 0.0
      %970 = vset.pattern.permute.xlu0 23
      %971 = vperm.xlu0 %970, %v198
      %v972 = vpop.permute.xlu0 %971
      %v974 = vmul.f32 %v972, %v968
      %v975 = vmul.f32 %v972, %v969
      %v976 = vadd.f32 %v918, %v974
      %v977 = vadd.f32 %v919, %v975
      %978 = vset.pattern.permute.xlu0 24
      %979 = vperm.xlu0 %978, %v198
      %v980 = vpop.permute.xlu0 %979
      %v982 = vmul.f32 %v980, %v277
      %v983 = vmul.f32 %v980, %v278
      %v984 = vadd.f32 %v947, %v982
      %v985 = vadd.f32 %v948, %v983
      %986 = vrot.lane.b32.xlu0 %v277, 127
      %v987 = vpop.permute.xlu0 %986
      %988 = vrot.lane.b32.xlu0 %v278, 127
      %v989 = vpop.permute.xlu0 %988
      %vm990 = vcmp.lt.s32.totalorder %v284, 127
      %v991 = vsel %vm990, %v987, %v989
      %v992 = vsel %vm990, %v989, %v987
      %vm993 = vmand %vm212, %vm236
      %v994 = vsel %vm993, 1, 0
      %v995 = vlaneseq
      %v996 = vshrl.u32 %v995, 7
      %v997 = vsub.s32 0, %v996
      %v998 = vrot.slane %v994, %v997
      %v999 = vlaneseq
      %v1000 = vshrl.u32 %v999, 7
      %v1001 = vsub.s32 1, %v1000
      %v1002 = vrot.slane %v994, %v1001
      %vm1003 = vcmp.eq.s32.totalorder %v998, 1
      %vm1004 = vcmp.eq.s32.totalorder %v1002, 1
      %v1005 = vsel %vm1003, %v991, 0.0
      %v1006 = vsel %vm1004, %v992, 0.0
      %1007 = vset.pattern.permute.xlu0 25
      %1008 = vperm.xlu0 %1007, %v198
      %v1009 = vpop.permute.xlu0 %1008
      %v1011 = vmul.f32 %v1009, %v1005
      %v1012 = vmul.f32 %v1009, %v1006
      %v1013 = vadd.f32 %v976, %v1011
      %v1014 = vadd.f32 %v977, %v1012
      %1015 = vrot.lane.b32.xlu0 %v277, 126
      %v1016 = vpop.permute.xlu0 %1015
      %1017 = vrot.lane.b32.xlu0 %v278, 126
      %v1018 = vpop.permute.xlu0 %1017
      %vm1019 = vcmp.lt.s32.totalorder %v284, 126
      %v1020 = vsel %vm1019, %v1016, %v1018
      %v1021 = vsel %vm1019, %v1018, %v1016
      %vm1022 = vmand %vm212, %vm239
      %v1023 = vsel %vm1022, 1, 0
      %v1024 = vlaneseq
      %v1025 = vshrl.u32 %v1024, 7
      %v1026 = vsub.s32 0, %v1025
      %v1027 = vrot.slane %v1023, %v1026
      %v1028 = vlaneseq
      %v1029 = vshrl.u32 %v1028, 7
      %v1030 = vsub.s32 1, %v1029
      %v1031 = vrot.slane %v1023, %v1030
      %vm1032 = vcmp.eq.s32.totalorder %v1027, 1
      %vm1033 = vcmp.eq.s32.totalorder %v1031, 1
      %v1034 = vsel %vm1032, %v1020, 0.0
      %v1035 = vsel %vm1033, %v1021, 0.0
      %1036 = vset.pattern.permute.xlu0 26
      %1037 = vperm.xlu0 %1036, %v198
      %v1038 = vpop.permute.xlu0 %1037
      %v1040 = vmul.f32 %v1038, %v1034
      %v1041 = vmul.f32 %v1038, %v1035
      %v1042 = vadd.f32 %v984, %v1040
      %v1043 = vadd.f32 %v985, %v1041
      %1044 = vrot.lane.b32.xlu0 %v277, 125
      %v1045 = vpop.permute.xlu0 %1044
      %1046 = vrot.lane.b32.xlu0 %v278, 125
      %v1047 = vpop.permute.xlu0 %1046
      %vm1048 = vcmp.lt.s32.totalorder %v284, 125
      %v1049 = vsel %vm1048, %v1045, %v1047
      %v1050 = vsel %vm1048, %v1047, %v1045
      %vm1051 = vmand %vm212, %vm242
      %v1052 = vsel %vm1051, 1, 0
      %v1053 = vlaneseq
      %v1054 = vshrl.u32 %v1053, 7
      %v1055 = vsub.s32 0, %v1054
      %v1056 = vrot.slane %v1052, %v1055
      %v1057 = vlaneseq
      %v1058 = vshrl.u32 %v1057, 7
      %v1059 = vsub.s32 1, %v1058
      %v1060 = vrot.slane %v1052, %v1059
      %vm1061 = vcmp.eq.s32.totalorder %v1056, 1
      %vm1062 = vcmp.eq.s32.totalorder %v1060, 1
      %v1063 = vsel %vm1061, %v1049, 0.0
      %v1064 = vsel %vm1062, %v1050, 0.0
      %1065 = vset.pattern.permute.xlu0 27
      %1066 = vperm.xlu0 %1065, %v198
      %v1067 = vpop.permute.xlu0 %1066
      %v1069 = vmul.f32 %v1067, %v1063
      %v1070 = vmul.f32 %v1067, %v1064
      %v1071 = vadd.f32 %v1013, %v1069
      %v1072 = vadd.f32 %v1014, %v1070
      %1073 = vrot.lane.b32.xlu0 %v277, 115
      %v1074 = vpop.permute.xlu0 %1073
      %1075 = vrot.lane.b32.xlu0 %v278, 115
      %v1076 = vpop.permute.xlu0 %1075
      %vm1077 = vcmp.lt.s32.totalorder %v284, 115
      %v1078 = vsel %vm1077, %v1074, %v1076
      %v1079 = vsel %vm1077, %v1076, %v1074
      %vm1080 = vmand %vm215, %vm224
      %v1081 = vsel %vm1080, 1, 0
      %v1082 = vlaneseq
      %v1083 = vshrl.u32 %v1082, 7
      %v1084 = vsub.s32 0, %v1083
      %v1085 = vrot.slane %v1081, %v1084
      %v1086 = vlaneseq
      %v1087 = vshrl.u32 %v1086, 7
      %v1088 = vsub.s32 1, %v1087
      %v1089 = vrot.slane %v1081, %v1088
      %vm1090 = vcmp.eq.s32.totalorder %v1085, 1
      %vm1091 = vcmp.eq.s32.totalorder %v1089, 1
      %v1092 = vsel %vm1090, %v1078, 0.0
      %v1093 = vsel %vm1091, %v1079, 0.0
      %1094 = vset.pattern.permute.xlu0 28
      %1095 = vperm.xlu0 %1094, %v198
      %v1096 = vpop.permute.xlu0 %1095
      %v1098 = vmul.f32 %v1096, %v1092
      %v1099 = vmul.f32 %v1096, %v1093
      %v1100 = vadd.f32 %v1042, %v1098
      %v1101 = vadd.f32 %v1043, %v1099
      %1102 = vrot.lane.b32.xlu0 %v277, 114
      %v1103 = vpop.permute.xlu0 %1102
      %1104 = vrot.lane.b32.xlu0 %v278, 114
      %v1105 = vpop.permute.xlu0 %1104
      %vm1106 = vcmp.lt.s32.totalorder %v284, 114
      %v1107 = vsel %vm1106, %v1103, %v1105
      %v1108 = vsel %vm1106, %v1105, %v1103
      %vm1109 = vmand %vm215, %vm227
      %v1110 = vsel %vm1109, 1, 0
      %v1111 = vlaneseq
      %v1112 = vshrl.u32 %v1111, 7
      %v1113 = vsub.s32 0, %v1112
      %v1114 = vrot.slane %v1110, %v1113
      %v1115 = vlaneseq
      %v1116 = vshrl.u32 %v1115, 7
      %v1117 = vsub.s32 1, %v1116
      %v1118 = vrot.slane %v1110, %v1117
      %vm1119 = vcmp.eq.s32.totalorder %v1114, 1
      %vm1120 = vcmp.eq.s32.totalorder %v1118, 1
      %v1121 = vsel %vm1119, %v1107, 0.0
      %v1122 = vsel %vm1120, %v1108, 0.0
      %1123 = vset.pattern.permute.xlu0 29
      %1124 = vperm.xlu0 %1123, %v198
      %v1125 = vpop.permute.xlu0 %1124
      %v1127 = vmul.f32 %v1125, %v1121
      %v1128 = vmul.f32 %v1125, %v1122
      %v1129 = vadd.f32 %v1071, %v1127
      %v1130 = vadd.f32 %v1072, %v1128
      %1131 = vrot.lane.b32.xlu0 %v277, 113
      %v1132 = vpop.permute.xlu0 %1131
      %1133 = vrot.lane.b32.xlu0 %v278, 113
      %v1134 = vpop.permute.xlu0 %1133
      %vm1135 = vcmp.lt.s32.totalorder %v284, 113
      %v1136 = vsel %vm1135, %v1132, %v1134
      %v1137 = vsel %vm1135, %v1134, %v1132
      %vm1138 = vmand %vm215, %vm230
      %v1139 = vsel %vm1138, 1, 0
      %v1140 = vlaneseq
      %v1141 = vshrl.u32 %v1140, 7
      %v1142 = vsub.s32 0, %v1141
      %v1143 = vrot.slane %v1139, %v1142
      %v1144 = vlaneseq
      %v1145 = vshrl.u32 %v1144, 7
      %v1146 = vsub.s32 1, %v1145
      %v1147 = vrot.slane %v1139, %v1146
      %vm1148 = vcmp.eq.s32.totalorder %v1143, 1
      %vm1149 = vcmp.eq.s32.totalorder %v1147, 1
      %v1150 = vsel %vm1148, %v1136, 0.0
      %v1151 = vsel %vm1149, %v1137, 0.0
      %1152 = vset.pattern.permute.xlu0 30
      %1153 = vperm.xlu0 %1152, %v198
      %v1154 = vpop.permute.xlu0 %1153
      %v1156 = vmul.f32 %v1154, %v1150
      %v1157 = vmul.f32 %v1154, %v1151
      %v1158 = vadd.f32 %v1100, %v1156
      %v1159 = vadd.f32 %v1101, %v1157
      %1160 = vrot.lane.b32.xlu0 %v277, 112
      %v1161 = vpop.permute.xlu0 %1160
      %1162 = vrot.lane.b32.xlu0 %v278, 112
      %v1163 = vpop.permute.xlu0 %1162
      %vm1164 = vcmp.lt.s32.totalorder %v284, 112
      %v1165 = vsel %vm1164, %v1161, %v1163
      %v1166 = vsel %vm1164, %v1163, %v1161
      %vm1167 = vmand %vm215, %vm233
      %v1168 = vsel %vm1167, 1, 0
      %v1169 = vlaneseq
      %v1170 = vshrl.u32 %v1169, 7
      %v1171 = vsub.s32 0, %v1170
      %v1172 = vrot.slane %v1168, %v1171
      %v1173 = vlaneseq
      %v1174 = vshrl.u32 %v1173, 7
      %v1175 = vsub.s32 1, %v1174
      %v1176 = vrot.slane %v1168, %v1175
      %vm1177 = vcmp.eq.s32.totalorder %v1172, 1
      %vm1178 = vcmp.eq.s32.totalorder %v1176, 1
      %v1179 = vsel %vm1177, %v1165, 0.0
      %v1180 = vsel %vm1178, %v1166, 0.0
      %1181 = vset.pattern.permute.xlu0 31
      %1182 = vperm.xlu0 %1181, %v198
      %v1183 = vpop.permute.xlu0 %1182
      %v1185 = vmul.f32 %v1183, %v1179
      %v1186 = vmul.f32 %v1183, %v1180
      %v1187 = vadd.f32 %v1129, %v1185
      %v1188 = vadd.f32 %v1130, %v1186
      %1189 = vrot.lane.b32.xlu0 %v277, 111
      %v1190 = vpop.permute.xlu0 %1189
      %1191 = vrot.lane.b32.xlu0 %v278, 111
      %v1192 = vpop.permute.xlu0 %1191
      %vm1193 = vcmp.lt.s32.totalorder %v284, 111
      %v1194 = vsel %vm1193, %v1190, %v1192
      %v1195 = vsel %vm1193, %v1192, %v1190
      %vm1196 = vmand %vm215, %vm236
      %v1197 = vsel %vm1196, 1, 0
      %v1198 = vlaneseq
      %v1199 = vshrl.u32 %v1198, 7
      %v1200 = vsub.s32 0, %v1199
      %v1201 = vrot.slane %v1197, %v1200
      %v1202 = vlaneseq
      %v1203 = vshrl.u32 %v1202, 7
      %v1204 = vsub.s32 1, %v1203
      %v1205 = vrot.slane %v1197, %v1204
      %vm1206 = vcmp.eq.s32.totalorder %v1201, 1
      %vm1207 = vcmp.eq.s32.totalorder %v1205, 1
      %v1208 = vsel %vm1206, %v1194, 0.0
      %v1209 = vsel %vm1207, %v1195, 0.0
      %1210 = vset.pattern.permute.xlu0 32
      %1211 = vperm.xlu0 %1210, %v198
      %v1212 = vpop.permute.xlu0 %1211
      %v1214 = vmul.f32 %v1212, %v1208
      %v1215 = vmul.f32 %v1212, %v1209
      %v1216 = vadd.f32 %v1158, %v1214
      %v1217 = vadd.f32 %v1159, %v1215
      %1218 = vrot.lane.b32.xlu0 %v277, 110
      %v1219 = vpop.permute.xlu0 %1218
      %1220 = vrot.lane.b32.xlu0 %v278, 110
      %v1221 = vpop.permute.xlu0 %1220
      %vm1222 = vcmp.lt.s32.totalorder %v284, 110
      %v1223 = vsel %vm1222, %v1219, %v1221
      %v1224 = vsel %vm1222, %v1221, %v1219
      %vm1225 = vmand %vm215, %vm239
      %v1226 = vsel %vm1225, 1, 0
      %v1227 = vlaneseq
      %v1228 = vshrl.u32 %v1227, 7
      %v1229 = vsub.s32 0, %v1228
      %v1230 = vrot.slane %v1226, %v1229
      %v1231 = vlaneseq
      %v1232 = vshrl.u32 %v1231, 7
      %v1233 = vsub.s32 1, %v1232
      %v1234 = vrot.slane %v1226, %v1233
      %vm1235 = vcmp.eq.s32.totalorder %v1230, 1
      %vm1236 = vcmp.eq.s32.totalorder %v1234, 1
      %v1237 = vsel %vm1235, %v1223, 0.0
      %v1238 = vsel %vm1236, %v1224, 0.0
      %1239 = vset.pattern.permute.xlu0 33
      %1240 = vperm.xlu0 %1239, %v198
      %v1241 = vpop.permute.xlu0 %1240
      %v1243 = vmul.f32 %v1241, %v1237
      %v1244 = vmul.f32 %v1241, %v1238
      %v1245 = vadd.f32 %v1187, %v1243
      %v1246 = vadd.f32 %v1188, %v1244
      %1247 = vrot.lane.b32.xlu0 %v277, 109
      %v1248 = vpop.permute.xlu0 %1247
      %1249 = vrot.lane.b32.xlu0 %v278, 109
      %v1250 = vpop.permute.xlu0 %1249
      %vm1251 = vcmp.lt.s32.totalorder %v284, 109
      %v1252 = vsel %vm1251, %v1248, %v1250
      %v1253 = vsel %vm1251, %v1250, %v1248
      %vm1254 = vmand %vm215, %vm242
      %v1255 = vsel %vm1254, 1, 0
      %v1256 = vlaneseq
      %v1257 = vshrl.u32 %v1256, 7
      %v1258 = vsub.s32 0, %v1257
      %v1259 = vrot.slane %v1255, %v1258
      %v1260 = vlaneseq
      %v1261 = vshrl.u32 %v1260, 7
      %v1262 = vsub.s32 1, %v1261
      %v1263 = vrot.slane %v1255, %v1262
      %vm1264 = vcmp.eq.s32.totalorder %v1259, 1
      %vm1265 = vcmp.eq.s32.totalorder %v1263, 1
      %v1266 = vsel %vm1264, %v1252, 0.0
      %v1267 = vsel %vm1265, %v1253, 0.0
      %1268 = vset.pattern.permute.xlu0 34
      %1269 = vperm.xlu0 %1268, %v198
      %v1270 = vpop.permute.xlu0 %1269
      %v1272 = vmul.f32 %v1270, %v1266
      %v1273 = vmul.f32 %v1270, %v1267
      %v1274 = vadd.f32 %v1216, %v1272
      %v1275 = vadd.f32 %v1217, %v1273
      %1276 = vrot.lane.b32.xlu0 %v277, 99
      %v1277 = vpop.permute.xlu0 %1276
      %1278 = vrot.lane.b32.xlu0 %v278, 99
      %v1279 = vpop.permute.xlu0 %1278
      %vm1280 = vcmp.lt.s32.totalorder %v284, 99
      %v1281 = vsel %vm1280, %v1277, %v1279
      %v1282 = vsel %vm1280, %v1279, %v1277
      %vm1283 = vmand %vm218, %vm224
      %v1284 = vsel %vm1283, 1, 0
      %v1285 = vlaneseq
      %v1286 = vshrl.u32 %v1285, 7
      %v1287 = vsub.s32 0, %v1286
      %v1288 = vrot.slane %v1284, %v1287
      %v1289 = vlaneseq
      %v1290 = vshrl.u32 %v1289, 7
      %v1291 = vsub.s32 1, %v1290
      %v1292 = vrot.slane %v1284, %v1291
      %vm1293 = vcmp.eq.s32.totalorder %v1288, 1
      %vm1294 = vcmp.eq.s32.totalorder %v1292, 1
      %v1295 = vsel %vm1293, %v1281, 0.0
      %v1296 = vsel %vm1294, %v1282, 0.0
      %1297 = vset.pattern.permute.xlu0 35
      %1298 = vperm.xlu0 %1297, %v198
      %v1299 = vpop.permute.xlu0 %1298
      %v1301 = vmul.f32 %v1299, %v1295
      %v1302 = vmul.f32 %v1299, %v1296
      %v1303 = vadd.f32 %v1245, %v1301
      %v1304 = vadd.f32 %v1246, %v1302
      %1305 = vrot.lane.b32.xlu0 %v277, 98
      %v1306 = vpop.permute.xlu0 %1305
      %1307 = vrot.lane.b32.xlu0 %v278, 98
      %v1308 = vpop.permute.xlu0 %1307
      %vm1309 = vcmp.lt.s32.totalorder %v284, 98
      %v1310 = vsel %vm1309, %v1306, %v1308
      %v1311 = vsel %vm1309, %v1308, %v1306
      %vm1312 = vmand %vm218, %vm227
      %v1313 = vsel %vm1312, 1, 0
      %v1314 = vlaneseq
      %v1315 = vshrl.u32 %v1314, 7
      %v1316 = vsub.s32 0, %v1315
      %v1317 = vrot.slane %v1313, %v1316
      %v1318 = vlaneseq
      %v1319 = vshrl.u32 %v1318, 7
      %v1320 = vsub.s32 1, %v1319
      %v1321 = vrot.slane %v1313, %v1320
      %vm1322 = vcmp.eq.s32.totalorder %v1317, 1
      %vm1323 = vcmp.eq.s32.totalorder %v1321, 1
      %v1324 = vsel %vm1322, %v1310, 0.0
      %v1325 = vsel %vm1323, %v1311, 0.0
      %1326 = vset.pattern.permute.xlu0 36
      %1327 = vperm.xlu0 %1326, %v198
      %v1328 = vpop.permute.xlu0 %1327
      %v1330 = vmul.f32 %v1328, %v1324
      %v1331 = vmul.f32 %v1328, %v1325
      %v1332 = vadd.f32 %v1274, %v1330
      %v1333 = vadd.f32 %v1275, %v1331
      %1334 = vrot.lane.b32.xlu0 %v277, 97
      %v1335 = vpop.permute.xlu0 %1334
      %1336 = vrot.lane.b32.xlu0 %v278, 97
      %v1337 = vpop.permute.xlu0 %1336
      %vm1338 = vcmp.lt.s32.totalorder %v284, 97
      %v1339 = vsel %vm1338, %v1335, %v1337
      %v1340 = vsel %vm1338, %v1337, %v1335
      %vm1341 = vmand %vm218, %vm230
      %v1342 = vsel %vm1341, 1, 0
      %v1343 = vlaneseq
      %v1344 = vshrl.u32 %v1343, 7
      %v1345 = vsub.s32 0, %v1344
      %v1346 = vrot.slane %v1342, %v1345
      %v1347 = vlaneseq
      %v1348 = vshrl.u32 %v1347, 7
      %v1349 = vsub.s32 1, %v1348
      %v1350 = vrot.slane %v1342, %v1349
      %vm1351 = vcmp.eq.s32.totalorder %v1346, 1
      %vm1352 = vcmp.eq.s32.totalorder %v1350, 1
      %v1353 = vsel %vm1351, %v1339, 0.0
      %v1354 = vsel %vm1352, %v1340, 0.0
      %1355 = vset.pattern.permute.xlu0 37
      %1356 = vperm.xlu0 %1355, %v198
      %v1357 = vpop.permute.xlu0 %1356
      %v1359 = vmul.f32 %v1357, %v1353
      %v1360 = vmul.f32 %v1357, %v1354
      %v1361 = vadd.f32 %v1303, %v1359
      %v1362 = vadd.f32 %v1304, %v1360
      %1363 = vrot.lane.b32.xlu0 %v277, 96
      %v1364 = vpop.permute.xlu0 %1363
      %1365 = vrot.lane.b32.xlu0 %v278, 96
      %v1366 = vpop.permute.xlu0 %1365
      %vm1367 = vcmp.lt.s32.totalorder %v284, 96
      %v1368 = vsel %vm1367, %v1364, %v1366
      %v1369 = vsel %vm1367, %v1366, %v1364
      %vm1370 = vmand %vm218, %vm233
      %v1371 = vsel %vm1370, 1, 0
      %v1372 = vlaneseq
      %v1373 = vshrl.u32 %v1372, 7
      %v1374 = vsub.s32 0, %v1373
      %v1375 = vrot.slane %v1371, %v1374
      %v1376 = vlaneseq
      %v1377 = vshrl.u32 %v1376, 7
      %v1378 = vsub.s32 1, %v1377
      %v1379 = vrot.slane %v1371, %v1378
      %vm1380 = vcmp.eq.s32.totalorder %v1375, 1
      %vm1381 = vcmp.eq.s32.totalorder %v1379, 1
      %v1382 = vsel %vm1380, %v1368, 0.0
      %v1383 = vsel %vm1381, %v1369, 0.0
      %1384 = vset.pattern.permute.xlu0 38
      %1385 = vperm.xlu0 %1384, %v198
      %v1386 = vpop.permute.xlu0 %1385
      %v1388 = vmul.f32 %v1386, %v1382
      %v1389 = vmul.f32 %v1386, %v1383
      %v1390 = vadd.f32 %v1332, %v1388
      %v1391 = vadd.f32 %v1333, %v1389
      %1392 = vrot.lane.b32.xlu0 %v277, 95
      %v1393 = vpop.permute.xlu0 %1392
      %1394 = vrot.lane.b32.xlu0 %v278, 95
      %v1395 = vpop.permute.xlu0 %1394
      %vm1396 = vcmp.lt.s32.totalorder %v284, 95
      %v1397 = vsel %vm1396, %v1393, %v1395
      %v1398 = vsel %vm1396, %v1395, %v1393
      %vm1399 = vmand %vm218, %vm236
      %v1400 = vsel %vm1399, 1, 0
      %v1401 = vlaneseq
      %v1402 = vshrl.u32 %v1401, 7
      %v1403 = vsub.s32 0, %v1402
      %v1404 = vrot.slane %v1400, %v1403
      %v1405 = vlaneseq
      %v1406 = vshrl.u32 %v1405, 7
      %v1407 = vsub.s32 1, %v1406
      %v1408 = vrot.slane %v1400, %v1407
      %vm1409 = vcmp.eq.s32.totalorder %v1404, 1
      %vm1410 = vcmp.eq.s32.totalorder %v1408, 1
      %v1411 = vsel %vm1409, %v1397, 0.0
      %v1412 = vsel %vm1410, %v1398, 0.0
      %1413 = vset.pattern.permute.xlu0 39
      %1414 = vperm.xlu0 %1413, %v198
      %v1415 = vpop.permute.xlu0 %1414
      %v1417 = vmul.f32 %v1415, %v1411
      %v1418 = vmul.f32 %v1415, %v1412
      %v1419 = vadd.f32 %v1361, %v1417
      %v1420 = vadd.f32 %v1362, %v1418
      %1421 = vrot.lane.b32.xlu0 %v277, 94
      %v1422 = vpop.permute.xlu0 %1421
      %1423 = vrot.lane.b32.xlu0 %v278, 94
      %v1424 = vpop.permute.xlu0 %1423
      %vm1425 = vcmp.lt.s32.totalorder %v284, 94
      %v1426 = vsel %vm1425, %v1422, %v1424
      %v1427 = vsel %vm1425, %v1424, %v1422
      %vm1428 = vmand %vm218, %vm239
      %v1429 = vsel %vm1428, 1, 0
      %v1430 = vlaneseq
      %v1431 = vshrl.u32 %v1430, 7
      %v1432 = vsub.s32 0, %v1431
      %v1433 = vrot.slane %v1429, %v1432
      %v1434 = vlaneseq
      %v1435 = vshrl.u32 %v1434, 7
      %v1436 = vsub.s32 1, %v1435
      %v1437 = vrot.slane %v1429, %v1436
      %vm1438 = vcmp.eq.s32.totalorder %v1433, 1
      %vm1439 = vcmp.eq.s32.totalorder %v1437, 1
      %v1440 = vsel %vm1438, %v1426, 0.0
      %v1441 = vsel %vm1439, %v1427, 0.0
      %1442 = vset.pattern.permute.xlu0 40
      %1443 = vperm.xlu0 %1442, %v198
      %v1444 = vpop.permute.xlu0 %1443
      %v1446 = vmul.f32 %v1444, %v1440
      %v1447 = vmul.f32 %v1444, %v1441
      %v1448 = vadd.f32 %v1390, %v1446
      %v1449 = vadd.f32 %v1391, %v1447
      %1450 = vrot.lane.b32.xlu0 %v277, 93
      %v1451 = vpop.permute.xlu0 %1450
      %1452 = vrot.lane.b32.xlu0 %v278, 93
      %v1453 = vpop.permute.xlu0 %1452
      %vm1454 = vcmp.lt.s32.totalorder %v284, 93
      %v1455 = vsel %vm1454, %v1451, %v1453
      %v1456 = vsel %vm1454, %v1453, %v1451
      %vm1457 = vmand %vm218, %vm242
      %v1458 = vsel %vm1457, 1, 0
      %v1459 = vlaneseq
      %v1460 = vshrl.u32 %v1459, 7
      %v1461 = vsub.s32 0, %v1460
      %v1462 = vrot.slane %v1458, %v1461
      %v1463 = vlaneseq
      %v1464 = vshrl.u32 %v1463, 7
      %v1465 = vsub.s32 1, %v1464
      %v1466 = vrot.slane %v1458, %v1465
      %vm1467 = vcmp.eq.s32.totalorder %v1462, 1
      %vm1468 = vcmp.eq.s32.totalorder %v1466, 1
      %v1469 = vsel %vm1467, %v1455, 0.0
      %v1470 = vsel %vm1468, %v1456, 0.0
      %1471 = vset.pattern.permute.xlu0 41
      %1472 = vperm.xlu0 %1471, %v198
      %v1473 = vpop.permute.xlu0 %1472
      %v1475 = vmul.f32 %v1473, %v1469
      %v1476 = vmul.f32 %v1473, %v1470
      %v1477 = vadd.f32 %v1419, %v1475
      %v1478 = vadd.f32 %v1420, %v1476
      %1479 = vrot.lane.b32.xlu0 %v277, 83
      %v1480 = vpop.permute.xlu0 %1479
      %1481 = vrot.lane.b32.xlu0 %v278, 83
      %v1482 = vpop.permute.xlu0 %1481
      %vm1483 = vcmp.lt.s32.totalorder %v284, 83
      %v1484 = vsel %vm1483, %v1480, %v1482
      %v1485 = vsel %vm1483, %v1482, %v1480
      %vm1486 = vmand %vm221, %vm224
      %v1487 = vsel %vm1486, 1, 0
      %v1488 = vlaneseq
      %v1489 = vshrl.u32 %v1488, 7
      %v1490 = vsub.s32 0, %v1489
      %v1491 = vrot.slane %v1487, %v1490
      %v1492 = vlaneseq
      %v1493 = vshrl.u32 %v1492, 7
      %v1494 = vsub.s32 1, %v1493
      %v1495 = vrot.slane %v1487, %v1494
      %vm1496 = vcmp.eq.s32.totalorder %v1491, 1
      %vm1497 = vcmp.eq.s32.totalorder %v1495, 1
      %v1498 = vsel %vm1496, %v1484, 0.0
      %v1499 = vsel %vm1497, %v1485, 0.0
      %1500 = vset.pattern.permute.xlu0 42
      %1501 = vperm.xlu0 %1500, %v198
      %v1502 = vpop.permute.xlu0 %1501
      %v1504 = vmul.f32 %v1502, %v1498
      %v1505 = vmul.f32 %v1502, %v1499
      %v1506 = vadd.f32 %v1448, %v1504
      %v1507 = vadd.f32 %v1449, %v1505
      %1508 = vrot.lane.b32.xlu0 %v277, 82
      %v1509 = vpop.permute.xlu0 %1508
      %1510 = vrot.lane.b32.xlu0 %v278, 82
      %v1511 = vpop.permute.xlu0 %1510
      %vm1512 = vcmp.lt.s32.totalorder %v284, 82
      %v1513 = vsel %vm1512, %v1509, %v1511
      %v1514 = vsel %vm1512, %v1511, %v1509
      %vm1515 = vmand %vm221, %vm227
      %v1516 = vsel %vm1515, 1, 0
      %v1517 = vlaneseq
      %v1518 = vshrl.u32 %v1517, 7
      %v1519 = vsub.s32 0, %v1518
      %v1520 = vrot.slane %v1516, %v1519
      %v1521 = vlaneseq
      %v1522 = vshrl.u32 %v1521, 7
      %v1523 = vsub.s32 1, %v1522
      %v1524 = vrot.slane %v1516, %v1523
      %vm1525 = vcmp.eq.s32.totalorder %v1520, 1
      %vm1526 = vcmp.eq.s32.totalorder %v1524, 1
      %v1527 = vsel %vm1525, %v1513, 0.0
      %v1528 = vsel %vm1526, %v1514, 0.0
      %1529 = vset.pattern.permute.xlu0 43
      %1530 = vperm.xlu0 %1529, %v198
      %v1531 = vpop.permute.xlu0 %1530
      %v1533 = vmul.f32 %v1531, %v1527
      %v1534 = vmul.f32 %v1531, %v1528
      %v1535 = vadd.f32 %v1477, %v1533
      %v1536 = vadd.f32 %v1478, %v1534
      %1537 = vrot.lane.b32.xlu0 %v277, 81
      %v1538 = vpop.permute.xlu0 %1537
      %1539 = vrot.lane.b32.xlu0 %v278, 81
      %v1540 = vpop.permute.xlu0 %1539
      %vm1541 = vcmp.lt.s32.totalorder %v284, 81
      %v1542 = vsel %vm1541, %v1538, %v1540
      %v1543 = vsel %vm1541, %v1540, %v1538
      %vm1544 = vmand %vm221, %vm230
      %v1545 = vsel %vm1544, 1, 0
      %v1546 = vlaneseq
      %v1547 = vshrl.u32 %v1546, 7
      %v1548 = vsub.s32 0, %v1547
      %v1549 = vrot.slane %v1545, %v1548
      %v1550 = vlaneseq
      %v1551 = vshrl.u32 %v1550, 7
      %v1552 = vsub.s32 1, %v1551
      %v1553 = vrot.slane %v1545, %v1552
      %vm1554 = vcmp.eq.s32.totalorder %v1549, 1
      %vm1555 = vcmp.eq.s32.totalorder %v1553, 1
      %v1556 = vsel %vm1554, %v1542, 0.0
      %v1557 = vsel %vm1555, %v1543, 0.0
      %1558 = vset.pattern.permute.xlu0 44
      %1559 = vperm.xlu0 %1558, %v198
      %v1560 = vpop.permute.xlu0 %1559
      %v1562 = vmul.f32 %v1560, %v1556
      %v1563 = vmul.f32 %v1560, %v1557
      %v1564 = vadd.f32 %v1506, %v1562
      %v1565 = vadd.f32 %v1507, %v1563
      %1566 = vrot.lane.b32.xlu0 %v277, 80
      %v1567 = vpop.permute.xlu0 %1566
      %1568 = vrot.lane.b32.xlu0 %v278, 80
      %v1569 = vpop.permute.xlu0 %1568
      %vm1570 = vcmp.lt.s32.totalorder %v284, 80
      %v1571 = vsel %vm1570, %v1567, %v1569
      %v1572 = vsel %vm1570, %v1569, %v1567
      %vm1573 = vmand %vm221, %vm233
      %v1574 = vsel %vm1573, 1, 0
      %v1575 = vlaneseq
      %v1576 = vshrl.u32 %v1575, 7
      %v1577 = vsub.s32 0, %v1576
      %v1578 = vrot.slane %v1574, %v1577
      %v1579 = vlaneseq
      %v1580 = vshrl.u32 %v1579, 7
      %v1581 = vsub.s32 1, %v1580
      %v1582 = vrot.slane %v1574, %v1581
      %vm1583 = vcmp.eq.s32.totalorder %v1578, 1
      %vm1584 = vcmp.eq.s32.totalorder %v1582, 1
      %v1585 = vsel %vm1583, %v1571, 0.0
      %v1586 = vsel %vm1584, %v1572, 0.0
      %1587 = vset.pattern.permute.xlu0 45
      %1588 = vperm.xlu0 %1587, %v198
      %v1589 = vpop.permute.xlu0 %1588
      %v1591 = vmul.f32 %v1589, %v1585
      %v1592 = vmul.f32 %v1589, %v1586
      %v1593 = vadd.f32 %v1535, %v1591
      %v1594 = vadd.f32 %v1536, %v1592
      %1595 = vrot.lane.b32.xlu0 %v277, 79
      %v1596 = vpop.permute.xlu0 %1595
      %1597 = vrot.lane.b32.xlu0 %v278, 79
      %v1598 = vpop.permute.xlu0 %1597
      %vm1599 = vcmp.lt.s32.totalorder %v284, 79
      %v1600 = vsel %vm1599, %v1596, %v1598
      %v1601 = vsel %vm1599, %v1598, %v1596
      %vm1602 = vmand %vm221, %vm236
      %v1603 = vsel %vm1602, 1, 0
      %v1604 = vlaneseq
      %v1605 = vshrl.u32 %v1604, 7
      %v1606 = vsub.s32 0, %v1605
      %v1607 = vrot.slane %v1603, %v1606
      %v1608 = vlaneseq
      %v1609 = vshrl.u32 %v1608, 7
      %v1610 = vsub.s32 1, %v1609
      %v1611 = vrot.slane %v1603, %v1610
      %vm1612 = vcmp.eq.s32.totalorder %v1607, 1
      %vm1613 = vcmp.eq.s32.totalorder %v1611, 1
      %v1614 = vsel %vm1612, %v1600, 0.0
      %v1615 = vsel %vm1613, %v1601, 0.0
      %1616 = vset.pattern.permute.xlu0 46
      %1617 = vperm.xlu0 %1616, %v198
      %v1618 = vpop.permute.xlu0 %1617
      %v1620 = vmul.f32 %v1618, %v1614
      %v1621 = vmul.f32 %v1618, %v1615
      %v1622 = vadd.f32 %v1564, %v1620
      %v1623 = vadd.f32 %v1565, %v1621
      %1624 = vrot.lane.b32.xlu0 %v277, 78
      %v1625 = vpop.permute.xlu0 %1624
      %1626 = vrot.lane.b32.xlu0 %v278, 78
      %v1627 = vpop.permute.xlu0 %1626
      %vm1628 = vcmp.lt.s32.totalorder %v284, 78
      %v1629 = vsel %vm1628, %v1625, %v1627
      %v1630 = vsel %vm1628, %v1627, %v1625
      %vm1631 = vmand %vm221, %vm239
      %v1632 = vsel %vm1631, 1, 0
      %v1633 = vlaneseq
      %v1634 = vshrl.u32 %v1633, 7
      %v1635 = vsub.s32 0, %v1634
      %v1636 = vrot.slane %v1632, %v1635
      %v1637 = vlaneseq
      %v1638 = vshrl.u32 %v1637, 7
      %v1639 = vsub.s32 1, %v1638
      %v1640 = vrot.slane %v1632, %v1639
      %vm1641 = vcmp.eq.s32.totalorder %v1636, 1
      %vm1642 = vcmp.eq.s32.totalorder %v1640, 1
      %v1643 = vsel %vm1641, %v1629, 0.0
      %v1644 = vsel %vm1642, %v1630, 0.0
      %1645 = vset.pattern.permute.xlu0 47
      %1646 = vperm.xlu0 %1645, %v198
      %v1647 = vpop.permute.xlu0 %1646
      %v1649 = vmul.f32 %v1647, %v1643
      %v1650 = vmul.f32 %v1647, %v1644
      %v1651 = vadd.f32 %v1593, %v1649
      %v1652 = vadd.f32 %v1594, %v1650
      %1653 = vrot.lane.b32.xlu0 %v277, 77
      %v1654 = vpop.permute.xlu0 %1653
      %1655 = vrot.lane.b32.xlu0 %v278, 77
      %v1656 = vpop.permute.xlu0 %1655
      %vm1657 = vcmp.lt.s32.totalorder %v284, 77
      %v1658 = vsel %vm1657, %v1654, %v1656
      %v1659 = vsel %vm1657, %v1656, %v1654
      %vm1660 = vmand %vm221, %vm242
      %v1661 = vsel %vm1660, 1, 0
      %v1662 = vlaneseq
      %v1663 = vshrl.u32 %v1662, 7
      %v1664 = vsub.s32 0, %v1663
      %v1665 = vrot.slane %v1661, %v1664
      %v1666 = vlaneseq
      %v1667 = vshrl.u32 %v1666, 7
      %v1668 = vsub.s32 1, %v1667
      %v1669 = vrot.slane %v1661, %v1668
      %vm1670 = vcmp.eq.s32.totalorder %v1665, 1
      %vm1671 = vcmp.eq.s32.totalorder %v1669, 1
      %v1672 = vsel %vm1670, %v1658, 0.0
      %v1673 = vsel %vm1671, %v1659, 0.0
      %1674 = vset.pattern.permute.xlu0 48
      %1675 = vperm.xlu0 %1674, %v198
      %v1676 = vpop.permute.xlu0 %1675
      %v1678 = vmul.f32 %v1676, %v1672
      %v1679 = vmul.f32 %v1676, %v1673
      %v1680 = vadd.f32 %v1622, %v1678
      %v1681 = vadd.f32 %v1623, %v1679
      %v1682 = vadd.f32 %v1680, %v1651
      %v1683 = vadd.f32 %v1681, %v1652
      %v1686 = vrot.slane %v1682, 1
      %v1687 = vrot.slane %v1683, 1
      %v1690 = vadd.f32 %v1682, %v1686
      %v1691 = vadd.f32 %v1683, %v1687
      %1692 = vset.pattern.permute.xlu0 49
      %1693 = vperm.xlu0 %1692, %v198
      %v1694 = vpop.permute.xlu0 %1693
      %v1696 = vadd.f32 %v1690, %v1694
      %v1697 = vadd.f32 %v1691, %v1694
      %v1698 = vxor.u32 %v1696, 2147483648
      %v1699 = vxor.u32 %v1697, 2147483648
      %v1700 = vmul.f32 %v1698, 1.442695
      %v1701 = vpow.pop %v1700
      %v1702 = vmul.f32 %v1699, 1.442695
      %v1703 = vpow.pop %v1702
      %v1704 = vadd.f32 %v1701, 1.0
      %v1705 = vadd.f32 %v1703, 1.0
      %v1706 = vrcp.pop %v1704
      %v1707 = vmul.f32 1.0, %v1706
      %v1708 = vrcp.pop %v1705
      %v1709 = vmul.f32 1.0, %v1708
      %v1710 = vlaneseq
      %v1711 = vshrl.u32 %v1710, 7
      %v1712 = vsub.s32 0, %v1711
      %v1713 = vrot.slane %v1707, %v1712
      %v1714 = vlaneseq
      %v1715 = vshrl.u32 %v1714, 7
      %v1716 = vsub.s32 0, %v1715
      %v1717 = vrot.slane %v1709, %v1716
      %v1720 = vcombine.low %v1713, %v1717
      %v1722 = vmul.f32 %v243, %v1720
      %1723 = vst [vmem:[%s197] sm:$0xff] %v1722
      %p1724 = scmp.lt.s32.totalorder %s15, 1
      %s1725 = scalar_select %p1724, %s15, 1
      %s1726 = smul.addr %s1725, 2
      %s1727 = smul.addr %s1726, 4
      %s1728 = scalar_lea.vmem %s4, %s1727
      // Predicated region
      $region37: #{_lambda_.1} parent=35 // pred_check
        %p1729 = pneg %p122
      $region38: #{_lambda_.1} parent=35 // pred_check_branch
        %1731 = sbr.rel (%p1729) target = $region40
      $region39: #{_lambda_.1} parent=35 // pred_region
        _
      $region40: #{_lambda_.1} parent=35 // pred_fallthru
        _
    $region36: #{_lambda_.1} parent=5 // pred_fallthru
      _
    %p1732 = scmp.le.s32.totalorder 2, %s10
    // Predicated region
    $region41: #{_lambda_.1} parent=5 // pred_check
      %p1733 = pneg %p1732
    $region42: #{_lambda_.1} parent=5 // pred_check_branch
      %1735 = sbr.rel (%p1733) target = $region44
    $region43: #{_lambda_.1} parent=5 // pred_region
      %s1736 = ssub.s32 %s10, 2
      // Predicated region
      $region45: #{_lambda_.1} parent=43 // pred_check
        %p1737 = pneg %p128
      $region46: #{_lambda_.1} parent=43 // pred_check_branch
        %1739 = sbr.rel (%p1737) target = $region48
      $region47: #{_lambda_.1} parent=43 // pred_region
        %p1740 = scmp.lt.s32.totalorder %s16, 1
        %s1741 = scalar_select %p1740, %s16, 1
        %s1742 = smul.addr %s1741, 2
        %s1743 = smul.addr %s1742, 4
        %s1744 = scalar_lea.vmem %s4, %s1743
      $region48: #{_lambda_.1} parent=43 // pred_fallthru
        _
    $region44: #{_lambda_.1} parent=5 // pred_fallthru
      _
  $region6: #{_lambda_.1} parent=0 // loop_footer
    %s14 = sadd.s32 1, %s10
  $region7: #{_lambda_.1} parent=0 // loop_footer_branch
    %9 = sbr.rel target = $region3
  $region8: #{_lambda_.1} parent=0 // loop_exit
    _

</llo_original>
